<compile_context>
chip_gen: v7x
topology: tpu7x:2x2x1
jax: 0.10.0
libtpu: 0.0.40
codegen_flags: <defaults>
</compile_context>

<pallas_src>
import functools
import math

import jax
import jax.numpy as jnp
from jax.experimental import pallas as pl
from jax.experimental.pallas import tpu as pltpu


# ---------------------------------------------------------------------------
# In-kernel helpers (traced inside the Pallas kernel body)
# ---------------------------------------------------------------------------
def _layernorm(x, w, b, eps=1e-5):
    # PyTorch nn.LayerNorm: biased variance, eps inside sqrt. Keep f32.
    mu = jnp.mean(x, axis=-1, keepdims=True)
    var = jnp.mean((x - mu) ** 2, axis=-1, keepdims=True)
    return (x - mu) * jax.lax.rsqrt(var + eps) * w + b


def _gelu_tanh(x):
    # GELU(approximate='tanh'), f32.
    c = math.sqrt(2.0 / math.pi)
    return 0.5 * x * (1.0 + jnp.tanh(c * (x + 0.044715 * x * x * x)))


# ---------------------------------------------------------------------------
# Pallas kernels
# ---------------------------------------------------------------------------
def transformer_block_kernel(n_head,
                             x_ref, mask_ref, ln1w_ref, ln1b_ref,
                             wqkv_ref, bqkv_ref, wproj_ref, bproj_ref,
                             ln2w_ref, ln2b_ref,
                             wfc1_ref, bfc1_ref, wfc2_ref, bfc2_ref,
                             o_ref):
    x = x_ref[0]                       # (T, C) f32 residual stream
    T, C = x.shape
    hd = C // n_head
    scale = 1.0 / math.sqrt(hd)
    mask = mask_ref[...]               # (T, T) additive causal bias: 0 / -1e30

    # ---- attention branch:  x = x + proj(softmax(q k^T / sqrt(hd)) v) ----
    xn = _layernorm(x, ln1w_ref[0], ln1b_ref[0]).astype(jnp.bfloat16)
    qkv = jnp.dot(xn, wqkv_ref[...],
                  preferred_element_type=jnp.float32) + bqkv_ref[0]   # (T, 3C) f32
    q = (qkv[:, 0:C] * scale).astype(jnp.bfloat16)   # fold 1/sqrt(hd) into q once
    k = qkv[:, C:2 * C].astype(jnp.bfloat16)
    v = qkv[:, 2 * C:3 * C].astype(jnp.bfloat16)

    attn = jnp.zeros((T, C), jnp.float32)
    # Per-head attention with the output projection fused in as a K-tiled
    # accumulation (sum_h o_h @ Wproj[h*hd:(h+1)*hd, :]). This avoids the
    # lane-concatenate of head outputs and bounds per-head live ranges.
    # TODO(synk): for long T, switch to flash-style KV tiling with an online
    # softmax so the (T, T) score tile never fully materializes.
    for h in range(n_head):
        qh = q[:, h * hd:(h + 1) * hd]
        kh = k[:, h * hd:(h + 1) * hd]
        vh = v[:, h * hd:(h + 1) * hd]
        # scores: contract head dim of q with head dim of k  -> (T, T)
        s = jax.lax.dot_general(qh, kh, (((1,), (1,)), ((), ())),
                                preferred_element_type=jnp.float32)
        s = s + mask
        s = s - jnp.max(s, axis=-1, keepdims=True)
        p = jnp.exp(s)
        p = p * pl.reciprocal(jnp.sum(p, axis=-1, keepdims=True), approx=True)
        oh = jnp.dot(p.astype(jnp.bfloat16), vh,
                     preferred_element_type=jnp.float32)               # (T, hd)
        attn = attn + jnp.dot(oh.astype(jnp.bfloat16),
                              wproj_ref[h * hd:(h + 1) * hd, :],
                              preferred_element_type=jnp.float32)      # (T, C)
    x = x + attn + bproj_ref[0]
    # TODO(synk): attention/residual dropout omitted (eval-mode identity)

    # ---- MLP branch:  x = x + fc2(gelu(fc1(ln2(x)))) ----
    xn2 = _layernorm(x, ln2w_ref[0], ln2b_ref[0]).astype(jnp.bfloat16)
    h1 = jnp.dot(xn2, wfc1_ref[...],
                 preferred_element_type=jnp.float32) + bfc1_ref[0]     # (T, 4C) f32
    h1 = _gelu_tanh(h1).astype(jnp.bfloat16)
    h2 = jnp.dot(h1, wfc2_ref[...],
                 preferred_element_type=jnp.float32) + bfc2_ref[0]     # (T, C) f32
    o_ref[0] = x + h2


def lm_head_kernel(x_ref, lnfw_ref, lnfb_ref, wte_ref, bout_ref, o_ref):
    x = x_ref[0]                       # (T, C) f32
    xn = _layernorm(x, lnfw_ref[0], lnfb_ref[0]).astype(jnp.bfloat16)
    w = wte_ref[...]                   # (TV, C) bf16 — tied embedding rows
    # logits_tile = xn @ w.T  (contract on C for both; no transposed wte copy)
    logits = jax.lax.dot_general(xn, w, (((1,), (1,)), ((), ())),
                                 preferred_element_type=jnp.float32)   # (T, TV)
    o_ref[0] = logits + bout_ref[0]


# ---------------------------------------------------------------------------
# Wrappers (pallas_call plumbing)
# ---------------------------------------------------------------------------
def _vmem_limit_bytes(block_bytes, slack=8 << 20):
    # x2: the pipeline double-buffers each input block.
    est = 2 * block_bytes + slack
    return int(min(max(est, 16 << 20), 48 << 20))


def run_transformer_block(x, causal_bias, p, n_head):
    B, T, C = x.shape

    def const_spec(shape):
        return pl.BlockSpec(shape, lambda b: (0,) * len(shape))

    weight_bytes = (C * 3 * C + C * C + C * 4 * C + 4 * C * C) * 2   # bf16
    act_bytes = 2 * T * C * 4 + T * T * 4 + T * 4 * C * 4
    return pl.pallas_call(
        functools.partial(transformer_block_kernel, n_head),
        out_shape=jax.ShapeDtypeStruct((B, T, C), x.dtype),
        grid=(B,),
        in_specs=[
            pl.BlockSpec((1, T, C), lambda b: (b, 0, 0)),
            const_spec((T, T)),
            const_spec((1, C)), const_spec((1, C)),
            const_spec((C, 3 * C)), const_spec((1, 3 * C)),
            const_spec((C, C)), const_spec((1, C)),
            const_spec((1, C)), const_spec((1, C)),
            const_spec((C, 4 * C)), const_spec((1, 4 * C)),
            const_spec((4 * C, C)), const_spec((1, C)),
        ],
        out_specs=pl.BlockSpec((1, T, C), lambda b: (b, 0, 0)),
        compiler_params=pltpu.CompilerParams(
            dimension_semantics=("parallel",),
            vmem_limit_bytes=_vmem_limit_bytes(weight_bytes + act_bytes)),
    )(x, causal_bias,
      p["ln1_w"], p["ln1_b"], p["w_qkv"], p["b_qkv"], p["w_proj"], p["b_proj"],
      p["ln2_w"], p["ln2_b"], p["w_fc1"], p["b_fc1"], p["w_fc2"], p["b_fc2"])


def _pick_vocab_tile(V):
    # Lane-dense tiles (multiple of 128) that divide V; fall back to V itself
    # for toy vocabularies.
    for tv in (2048, 1024, 512, 256, 128):
        if V % tv == 0:
            return tv
    return V


def run_lm_head(x, lnf_w, lnf_b, wte, b_out):
    B, T, C = x.shape
    V = wte.shape[0]
    TV = _pick_vocab_tile(V)
    block_bytes = TV * C * 2 + T * C * 4 + T * TV * 4
    return pl.pallas_call(
        lm_head_kernel,
        out_shape=jax.ShapeDtypeStruct((B, T, V), jnp.float32),
        grid=(B, V // TV),
        in_specs=[
            pl.BlockSpec((1, T, C), lambda b, v: (b, 0, 0)),
            pl.BlockSpec((1, C), lambda b, v: (0, 0)),
            pl.BlockSpec((1, C), lambda b, v: (0, 0)),
            pl.BlockSpec((TV, C), lambda b, v: (v, 0)),
            pl.BlockSpec((1, TV), lambda b, v: (0, v)),
        ],
        out_specs=pl.BlockSpec((1, T, TV), lambda b, v: (b, 0, v)),
        compiler_params=pltpu.CompilerParams(
            dimension_semantics=("parallel", "parallel"),
            vmem_limit_bytes=_vmem_limit_bytes(block_bytes)),
    )(x, lnf_w, lnf_b, wte, b_out)


def gpt_forward(params, tokens, n_head):
    # Embedding lookups + position add are glue (plain JAX); all matmul /
    # attention / layernorm / GELU hot paths run inside the Pallas kernels.
    B, T = tokens.shape
    tok_emb = jnp.take(params["wte"], tokens, axis=0).astype(jnp.float32)  # (B,T,C)
    pos_emb = params["wpe"][:T].astype(jnp.float32)                        # (T,C)
    x = tok_emb + pos_emb[None, :, :]
    # Additive causal bias, built once (finite -1e30 instead of -inf).
    causal_bias = jnp.where(jnp.arange(T)[:, None] >= jnp.arange(T)[None, :],
                            jnp.float32(0.0), jnp.float32(-1e30))
    for blk in params["blocks"]:
        x = run_transformer_block(x, causal_bias, blk, n_head)
    return run_lm_head(x, params["lnf_w"], params["lnf_b"],
                       params["wte"], params["b_out"])                     # (B,T,V)


# ---------------------------------------------------------------------------
# Deterministic parameter initialization (mirrors GPT._init_weights)
# ---------------------------------------------------------------------------
def init_gpt_params(key, vocab_size, block_size, n_layer, n_embd):
    C = n_embd
    keys = jax.random.split(key, 2 + 4 * n_layer)
    std = 0.02

    def normal_bf16(k, shape):
        return (std * jax.random.normal(k, shape, jnp.float32)).astype(jnp.bfloat16)

    # Tied embedding / LM-head table stored once, in bf16 (matmul operand).
    wte = normal_bf16(keys[0], (vocab_size, C))
    wpe = std * jax.random.normal(keys[1], (block_size, C), jnp.float32)

    blocks = []
    for l in range(n_layer):
        k0, k1, k2, k3 = keys[2 + 4 * l: 6 + 4 * l]
        blocks.append(dict(
            ln1_w=jnp.ones((1, C), jnp.float32),
            ln1_b=jnp.zeros((1, C), jnp.float32),
            w_qkv=normal_bf16(k0, (C, 3 * C)),
            b_qkv=jnp.zeros((1, 3 * C), jnp.float32),
            w_proj=normal_bf16(k1, (C, C)),
            b_proj=jnp.zeros((1, C), jnp.float32),
            ln2_w=jnp.ones((1, C), jnp.float32),
            ln2_b=jnp.zeros((1, C), jnp.float32),
            w_fc1=normal_bf16(k2, (C, 4 * C)),
            b_fc1=jnp.zeros((1, 4 * C), jnp.float32),
            w_fc2=normal_bf16(k3, (4 * C, C)),
            b_fc2=jnp.zeros((1, C), jnp.float32),
        ))

    return dict(
        wte=wte,
        wpe=wpe,
        blocks=blocks,
        lnf_w=jnp.ones((1, C), jnp.float32),
        lnf_b=jnp.zeros((1, C), jnp.float32),
        # weight tying: output_layer.weight = embeddings.weight
        # (wte reused directly in the LM-head kernel; no transposed copy)
        b_out=jnp.zeros((1, vocab_size), jnp.float32),
    )


# ---------------------------------------------------------------------------
if __name__ == "__main__":
    VOCAB, BLOCK, N_LAYER, N_HEAD, N_EMBD = 64, 16, 2, 2, 32
    B, T = 2, 8

    key = jax.random.PRNGKey(0)
    pkey, tkey = jax.random.split(key)
    params = init_gpt_params(pkey, VOCAB, BLOCK, N_LAYER, N_EMBD)
    tokens = jax.random.randint(tkey, (B, T), 0, VOCAB, dtype=jnp.int32)

    logits = gpt_forward(params, tokens, N_HEAD)
    logits = jax.block_until_ready(logits)

    assert logits.shape == (B, T, VOCAB), logits.shape
    assert jnp.all(jnp.isfinite(logits))
    print("KERNEL_OK")
</pallas_src>

<mosaic_0001>
module attributes {stable_mosaic.version = 11 : i64} {
  func.func @transformer_block_kernel(%arg0: i32, %arg1: memref<1x8x32xf32, #tpu.memory_space<vmem>>, %arg2: memref<8x8xf32, #tpu.memory_space<vmem>>, %arg3: memref<1x32xf32, #tpu.memory_space<vmem>>, %arg4: memref<1x32xf32, #tpu.memory_space<vmem>>, %arg5: memref<32x96xbf16, #tpu.memory_space<vmem>>, %arg6: memref<1x96xf32, #tpu.memory_space<vmem>>, %arg7: memref<32x32xbf16, #tpu.memory_space<vmem>>, %arg8: memref<1x32xf32, #tpu.memory_space<vmem>>, %arg9: memref<1x32xf32, #tpu.memory_space<vmem>>, %arg10: memref<1x32xf32, #tpu.memory_space<vmem>>, %arg11: memref<32x128xbf16, #tpu.memory_space<vmem>>, %arg12: memref<1x128xf32, #tpu.memory_space<vmem>>, %arg13: memref<128x32xbf16, #tpu.memory_space<vmem>>, %arg14: memref<1x32xf32, #tpu.memory_space<vmem>>, %arg15: memref<1x8x32xf32, #tpu.memory_space<vmem>>) attributes {dimension_semantics = [#tpu.dimension_semantics<parallel>], iteration_bounds = array<i64: 2>, scalar_prefetch = 0 : i64, scratch_operands = 0 : i64, tpu.core_type = #tpu.core_type<tc>, window_params = [{transform_indices = @transform_0, window_bounds = array<i64: 1, 8, 32>}, {pipeline_mode = #tpu.pipeline_mode<synchronous>, transform_indices = @transform_1, window_bounds = array<i64: 8, 8>}, {pipeline_mode = #tpu.pipeline_mode<synchronous>, transform_indices = @transform_2, window_bounds = array<i64: 1, 32>}, {pipeline_mode = #tpu.pipeline_mode<synchronous>, transform_indices = @transform_3, window_bounds = array<i64: 1, 32>}, {pipeline_mode = #tpu.pipeline_mode<synchronous>, transform_indices = @transform_4, window_bounds = array<i64: 32, 96>}, {pipeline_mode = #tpu.pipeline_mode<synchronous>, transform_indices = @transform_5, window_bounds = array<i64: 1, 96>}, {pipeline_mode = #tpu.pipeline_mode<synchronous>, transform_indices = @transform_6, window_bounds = array<i64: 32, 32>}, {pipeline_mode = #tpu.pipeline_mode<synchronous>, transform_indices = @transform_7, window_bounds = array<i64: 1, 32>}, {pipeline_mode = #tpu.pipeline_mode<synchronous>, transform_indices = @transform_8, window_bounds = array<i64: 1, 32>}, {pipeline_mode = #tpu.pipeline_mode<synchronous>, transform_indices = @transform_9, window_bounds = array<i64: 1, 32>}, {pipeline_mode = #tpu.pipeline_mode<synchronous>, transform_indices = @transform_10, window_bounds = array<i64: 32, 128>}, {pipeline_mode = #tpu.pipeline_mode<synchronous>, transform_indices = @transform_11, window_bounds = array<i64: 1, 128>}, {pipeline_mode = #tpu.pipeline_mode<synchronous>, transform_indices = @transform_12, window_bounds = array<i64: 128, 32>}, {pipeline_mode = #tpu.pipeline_mode<synchronous>, transform_indices = @transform_13, window_bounds = array<i64: 1, 32>}, {transform_indices = @transform_14, window_bounds = array<i64: 1, 8, 32>}]} {
    %c0 = arith.constant 0 : index
    %c0_0 = arith.constant 0 : index
    %c0_1 = arith.constant 0 : index
    %0 = vector.load %arg1[%c0, %c0_0, %c0_1] : memref<1x8x32xf32, #tpu.memory_space<vmem>>, vector<1x8x32xf32>
    %1 = vector.shape_cast %0 : vector<1x8x32xf32> to vector<8x32xf32>
    %c0_2 = arith.constant 0 : index
    %c0_3 = arith.constant 0 : index
    %2 = vector.load %arg2[%c0_2, %c0_3] : memref<8x8xf32, #tpu.memory_space<vmem>>, vector<8x8xf32>
    %c0_4 = arith.constant 0 : index
    %c0_5 = arith.constant 0 : index
    %3 = vector.load %arg3[%c0_4, %c0_5] : memref<1x32xf32, #tpu.memory_space<vmem>>, vector<1x32xf32>
    %4 = vector.shape_cast %3 : vector<1x32xf32> to vector<32xf32>
    %c0_6 = arith.constant 0 : index
    %c0_7 = arith.constant 0 : index
    %5 = vector.load %arg4[%c0_6, %c0_7] : memref<1x32xf32, #tpu.memory_space<vmem>>, vector<1x32xf32>
    %6 = vector.shape_cast %5 : vector<1x32xf32> to vector<32xf32>
    %cst = arith.constant dense<0.000000e+00> : vector<8xf32>
    %7 = vector.multi_reduction <add>, %1, %cst [1] : vector<8x32xf32> to vector<8xf32>
    %8 = vector.shape_cast %7 : vector<8xf32> to vector<8x1xf32>
    %cst_8 = arith.constant 3.200000e+01 : f32
    %9 = vector.broadcast %cst_8 : f32 to vector<8x1xf32>
    %10 = arith.divf %8, %9 : vector<8x1xf32>
    %11 = vector.broadcast %10 : vector<8x1xf32> to vector<8x32xf32>
    %12 = arith.subf %1, %11 : vector<8x32xf32>
    %13 = arith.mulf %12, %12 : vector<8x32xf32>
    %cst_9 = arith.constant dense<0.000000e+00> : vector<8xf32>
    %14 = vector.multi_reduction <add>, %13, %cst_9 [1] : vector<8x32xf32> to vector<8xf32>
    %15 = vector.shape_cast %14 : vector<8xf32> to vector<8x1xf32>
    %cst_10 = arith.constant 3.200000e+01 : f32
    %16 = vector.broadcast %cst_10 : f32 to vector<8x1xf32>
    %17 = arith.divf %15, %16 : vector<8x1xf32>
    %18 = vector.broadcast %10 : vector<8x1xf32> to vector<8x32xf32>
    %19 = arith.subf %1, %18 : vector<8x32xf32>
    %cst_11 = arith.constant 9.99999974E-6 : f32
    %20 = vector.broadcast %cst_11 : f32 to vector<8x1xf32>
    %21 = arith.addf %17, %20 : vector<8x1xf32>
    %22 = math.rsqrt %21 : vector<8x1xf32>
    %23 = vector.broadcast %22 : vector<8x1xf32> to vector<8x32xf32>
    %24 = arith.mulf %19, %23 : vector<8x32xf32>
    %25 = vector.shape_cast %4 : vector<32xf32> to vector<1x32xf32>
    %26 = vector.broadcast %25 : vector<1x32xf32> to vector<8x32xf32>
    %27 = arith.mulf %24, %26 : vector<8x32xf32>
    %28 = vector.shape_cast %6 : vector<32xf32> to vector<1x32xf32>
    %29 = vector.broadcast %28 : vector<1x32xf32> to vector<8x32xf32>
    %30 = arith.addf %27, %29 : vector<8x32xf32>
    %31 = arith.truncf %30 : vector<8x32xf32> to vector<8x32xbf16>
    %c0_12 = arith.constant 0 : index
    %c0_13 = arith.constant 0 : index
    %32 = vector.load %arg5[%c0_12, %c0_13] : memref<32x96xbf16, #tpu.memory_space<vmem>>, vector<32x96xbf16>
    %cst_14 = arith.constant dense<0.000000e+00> : vector<8x96xf32>
    %33 = tpu.matmul %31, %32, %cst_14 {dimension_numbers = #tpu.dot_dimension_numbers<[1], [0], [0], [1], [0, 0, 1, 1], [], []>} : vector<8x32xbf16>, vector<32x96xbf16>, vector<8x96xf32> -> vector<8x96xf32>
    %c0_15 = arith.constant 0 : index
    %c0_16 = arith.constant 0 : index
    %34 = vector.load %arg6[%c0_15, %c0_16] : memref<1x96xf32, #tpu.memory_space<vmem>>, vector<1x96xf32>
    %35 = vector.shape_cast %34 : vector<1x96xf32> to vector<96xf32>
    %36 = vector.shape_cast %35 : vector<96xf32> to vector<1x96xf32>
    %37 = vector.broadcast %36 : vector<1x96xf32> to vector<8x96xf32>
    %38 = arith.addf %33, %37 : vector<8x96xf32>
    %39 = vector.extract_strided_slice %38 {offsets = [0, 0], sizes = [8, 32], strides = [1, 1]} : vector<8x96xf32> to vector<8x32xf32>
    %cst_17 = arith.constant 2.500000e-01 : f32
    %40 = vector.broadcast %cst_17 : f32 to vector<8x32xf32>
    %41 = arith.mulf %39, %40 : vector<8x32xf32>
    %42 = arith.truncf %41 : vector<8x32xf32> to vector<8x32xbf16>
    %43 = vector.extract_strided_slice %38 {offsets = [0, 32], sizes = [8, 32], strides = [1, 1]} : vector<8x96xf32> to vector<8x32xf32>
    %44 = arith.truncf %43 : vector<8x32xf32> to vector<8x32xbf16>
    %45 = vector.extract_strided_slice %38 {offsets = [0, 64], sizes = [8, 32], strides = [1, 1]} : vector<8x96xf32> to vector<8x32xf32>
    %46 = arith.truncf %45 : vector<8x32xf32> to vector<8x32xbf16>
    %cst_18 = arith.constant 0.000000e+00 : f32
    %47 = vector.broadcast %cst_18 : f32 to vector<8x32xf32>
    %48 = vector.extract_strided_slice %42 {offsets = [0, 0], sizes = [8, 16], strides = [1, 1]} : vector<8x32xbf16> to vector<8x16xbf16>
    %49 = vector.extract_strided_slice %44 {offsets = [0, 0], sizes = [8, 16], strides = [1, 1]} : vector<8x32xbf16> to vector<8x16xbf16>
    %50 = vector.extract_strided_slice %46 {offsets = [0, 0], sizes = [8, 16], strides = [1, 1]} : vector<8x32xbf16> to vector<8x16xbf16>
    %cst_19 = arith.constant dense<0.000000e+00> : vector<8x8xf32>
    %51 = tpu.matmul %48, %49, %cst_19 {dimension_numbers = #tpu.dot_dimension_numbers<[1], [1], [0], [0], [0, 0, 1, 0], [], []>} : vector<8x16xbf16>, vector<8x16xbf16>, vector<8x8xf32> -> vector<8x8xf32>
    %52 = arith.addf %51, %2 : vector<8x8xf32>
    %cst_20 = arith.constant dense<0xFF800000> : vector<8xf32>
    %53 = vector.multi_reduction <maximumf>, %52, %cst_20 [1] : vector<8x8xf32> to vector<8xf32>
    %54 = vector.shape_cast %53 : vector<8xf32> to vector<8x1xf32>
    %55 = vector.broadcast %54 : vector<8x1xf32> to vector<8x8xf32>
    %56 = arith.subf %52, %55 : vector<8x8xf32>
    %57 = math.exp %56 : vector<8x8xf32>
    %cst_21 = arith.constant dense<0.000000e+00> : vector<8xf32>
    %58 = vector.multi_reduction <add>, %57, %cst_21 [1] : vector<8x8xf32> to vector<8xf32>
    %59 = vector.shape_cast %58 : vector<8xf32> to vector<8x1xf32>
    %60 = tpu.reciprocal %59 {approx = true} : vector<8x1xf32> -> vector<8x1xf32>
    %61 = vector.broadcast %60 : vector<8x1xf32> to vector<8x8xf32>
    %62 = arith.mulf %57, %61 : vector<8x8xf32>
    %63 = arith.truncf %62 : vector<8x8xf32> to vector<8x8xbf16>
    %cst_22 = arith.constant dense<0.000000e+00> : vector<8x16xf32>
    %64 = tpu.matmul %63, %50, %cst_22 {dimension_numbers = #tpu.dot_dimension_numbers<[1], [0], [0], [1], [0, 0, 1, 1], [], []>} : vector<8x8xbf16>, vector<8x16xbf16>, vector<8x16xf32> -> vector<8x16xf32>
    %65 = arith.truncf %64 : vector<8x16xf32> to vector<8x16xbf16>
    %c0_23 = arith.constant 0 : index
    %c0_24 = arith.constant 0 : index
    %66 = vector.load %arg7[%c0_23, %c0_24] : memref<32x32xbf16, #tpu.memory_space<vmem>>, vector<16x32xbf16>
    %cst_25 = arith.constant dense<0.000000e+00> : vector<8x32xf32>
    %67 = tpu.matmul %65, %66, %cst_25 {dimension_numbers = #tpu.dot_dimension_numbers<[1], [0], [0], [1], [0, 0, 1, 1], [], []>} : vector<8x16xbf16>, vector<16x32xbf16>, vector<8x32xf32> -> vector<8x32xf32>
    %68 = arith.addf %47, %67 : vector<8x32xf32>
    %69 = vector.extract_strided_slice %42 {offsets = [0, 16], sizes = [8, 16], strides = [1, 1]} : vector<8x32xbf16> to vector<8x16xbf16>
    %70 = vector.extract_strided_slice %44 {offsets = [0, 16], sizes = [8, 16], strides = [1, 1]} : vector<8x32xbf16> to vector<8x16xbf16>
    %71 = vector.extract_strided_slice %46 {offsets = [0, 16], sizes = [8, 16], strides = [1, 1]} : vector<8x32xbf16> to vector<8x16xbf16>
    %cst_26 = arith.constant dense<0.000000e+00> : vector<8x8xf32>
    %72 = tpu.matmul %69, %70, %cst_26 {dimension_numbers = #tpu.dot_dimension_numbers<[1], [1], [0], [0], [0, 0, 1, 0], [], []>} : vector<8x16xbf16>, vector<8x16xbf16>, vector<8x8xf32> -> vector<8x8xf32>
    %73 = arith.addf %72, %2 : vector<8x8xf32>
    %cst_27 = arith.constant dense<0xFF800000> : vector<8xf32>
    %74 = vector.multi_reduction <maximumf>, %73, %cst_27 [1] : vector<8x8xf32> to vector<8xf32>
    %75 = vector.shape_cast %74 : vector<8xf32> to vector<8x1xf32>
    %76 = vector.broadcast %75 : vector<8x1xf32> to vector<8x8xf32>
    %77 = arith.subf %73, %76 : vector<8x8xf32>
    %78 = math.exp %77 : vector<8x8xf32>
    %cst_28 = arith.constant dense<0.000000e+00> : vector<8xf32>
    %79 = vector.multi_reduction <add>, %78, %cst_28 [1] : vector<8x8xf32> to vector<8xf32>
    %80 = vector.shape_cast %79 : vector<8xf32> to vector<8x1xf32>
    %81 = tpu.reciprocal %80 {approx = true} : vector<8x1xf32> -> vector<8x1xf32>
    %82 = vector.broadcast %81 : vector<8x1xf32> to vector<8x8xf32>
    %83 = arith.mulf %78, %82 : vector<8x8xf32>
    %84 = arith.truncf %83 : vector<8x8xf32> to vector<8x8xbf16>
    %cst_29 = arith.constant dense<0.000000e+00> : vector<8x16xf32>
    %85 = tpu.matmul %84, %71, %cst_29 {dimension_numbers = #tpu.dot_dimension_numbers<[1], [0], [0], [1], [0, 0, 1, 1], [], []>} : vector<8x8xbf16>, vector<8x16xbf16>, vector<8x16xf32> -> vector<8x16xf32>
    %86 = arith.truncf %85 : vector<8x16xf32> to vector<8x16xbf16>
    %c16 = arith.constant 16 : index
    %c0_30 = arith.constant 0 : index
    %87 = vector.load %arg7[%c16, %c0_30] : memref<32x32xbf16, #tpu.memory_space<vmem>>, vector<16x32xbf16>
    %cst_31 = arith.constant dense<0.000000e+00> : vector<8x32xf32>
    %88 = tpu.matmul %86, %87, %cst_31 {dimension_numbers = #tpu.dot_dimension_numbers<[1], [0], [0], [1], [0, 0, 1, 1], [], []>} : vector<8x16xbf16>, vector<16x32xbf16>, vector<8x32xf32> -> vector<8x32xf32>
    %89 = arith.addf %68, %88 : vector<8x32xf32>
    %90 = arith.addf %1, %89 : vector<8x32xf32>
    %c0_32 = arith.constant 0 : index
    %c0_33 = arith.constant 0 : index
    %91 = vector.load %arg8[%c0_32, %c0_33] : memref<1x32xf32, #tpu.memory_space<vmem>>, vector<1x32xf32>
    %92 = vector.shape_cast %91 : vector<1x32xf32> to vector<32xf32>
    %93 = vector.shape_cast %92 : vector<32xf32> to vector<1x32xf32>
    %94 = vector.broadcast %93 : vector<1x32xf32> to vector<8x32xf32>
    %95 = arith.addf %90, %94 : vector<8x32xf32>
    %c0_34 = arith.constant 0 : index
    %c0_35 = arith.constant 0 : index
    %96 = vector.load %arg9[%c0_34, %c0_35] : memref<1x32xf32, #tpu.memory_space<vmem>>, vector<1x32xf32>
    %97 = vector.shape_cast %96 : vector<1x32xf32> to vector<32xf32>
    %c0_36 = arith.constant 0 : index
    %c0_37 = arith.constant 0 : index
    %98 = vector.load %arg10[%c0_36, %c0_37] : memref<1x32xf32, #tpu.memory_space<vmem>>, vector<1x32xf32>
    %99 = vector.shape_cast %98 : vector<1x32xf32> to vector<32xf32>
    %cst_38 = arith.constant dense<0.000000e+00> : vector<8xf32>
    %100 = vector.multi_reduction <add>, %95, %cst_38 [1] : vector<8x32xf32> to vector<8xf32>
    %101 = vector.shape_cast %100 : vector<8xf32> to vector<8x1xf32>
    %cst_39 = arith.constant 3.200000e+01 : f32
    %102 = vector.broadcast %cst_39 : f32 to vector<8x1xf32>
    %103 = arith.divf %101, %102 : vector<8x1xf32>
    %104 = vector.broadcast %103 : vector<8x1xf32> to vector<8x32xf32>
    %105 = arith.subf %95, %104 : vector<8x32xf32>
    %106 = arith.mulf %105, %105 : vector<8x32xf32>
    %cst_40 = arith.constant dense<0.000000e+00> : vector<8xf32>
    %107 = vector.multi_reduction <add>, %106, %cst_40 [1] : vector<8x32xf32> to vector<8xf32>
    %108 = vector.shape_cast %107 : vector<8xf32> to vector<8x1xf32>
    %cst_41 = arith.constant 3.200000e+01 : f32
    %109 = vector.broadcast %cst_41 : f32 to vector<8x1xf32>
    %110 = arith.divf %108, %109 : vector<8x1xf32>
    %111 = vector.broadcast %103 : vector<8x1xf32> to vector<8x32xf32>
    %112 = arith.subf %95, %111 : vector<8x32xf32>
    %cst_42 = arith.constant 9.99999974E-6 : f32
    %113 = vector.broadcast %cst_42 : f32 to vector<8x1xf32>
    %114 = arith.addf %110, %113 : vector<8x1xf32>
    %115 = math.rsqrt %114 : vector<8x1xf32>
    %116 = vector.broadcast %115 : vector<8x1xf32> to vector<8x32xf32>
    %117 = arith.mulf %112, %116 : vector<8x32xf32>
    %118 = vector.shape_cast %97 : vector<32xf32> to vector<1x32xf32>
    %119 = vector.broadcast %118 : vector<1x32xf32> to vector<8x32xf32>
    %120 = arith.mulf %117, %119 : vector<8x32xf32>
    %121 = vector.shape_cast %99 : vector<32xf32> to vector<1x32xf32>
    %122 = vector.broadcast %121 : vector<1x32xf32> to vector<8x32xf32>
    %123 = arith.addf %120, %122 : vector<8x32xf32>
    %124 = arith.truncf %123 : vector<8x32xf32> to vector<8x32xbf16>
    %c0_43 = arith.constant 0 : index
    %c0_44 = arith.constant 0 : index
    %125 = vector.load %arg11[%c0_43, %c0_44] : memref<32x128xbf16, #tpu.memory_space<vmem>>, vector<32x128xbf16>
    %cst_45 = arith.constant dense<0.000000e+00> : vector<8x128xf32>
    %126 = tpu.matmul %124, %125, %cst_45 {dimension_numbers = #tpu.dot_dimension_numbers<[1], [0], [0], [1], [0, 0, 1, 1], [], []>} : vector<8x32xbf16>, vector<32x128xbf16>, vector<8x128xf32> -> vector<8x128xf32>
    %c0_46 = arith.constant 0 : index
    %c0_47 = arith.constant 0 : index
    %127 = vector.load %arg12[%c0_46, %c0_47] : memref<1x128xf32, #tpu.memory_space<vmem>>, vector<1x128xf32>
    %128 = vector.shape_cast %127 : vector<1x128xf32> to vector<128xf32>
    %129 = vector.shape_cast %128 : vector<128xf32> to vector<1x128xf32>
    %130 = vector.broadcast %129 : vector<1x128xf32> to vector<8x128xf32>
    %131 = arith.addf %126, %130 : vector<8x128xf32>
    %cst_48 = arith.constant 5.000000e-01 : f32
    %132 = vector.broadcast %cst_48 : f32 to vector<8x128xf32>
    %133 = arith.mulf %132, %131 : vector<8x128xf32>
    %cst_49 = arith.constant 4.471500e-02 : f32
    %134 = vector.broadcast %cst_49 : f32 to vector<8x128xf32>
    %135 = arith.mulf %134, %131 : vector<8x128xf32>
    %136 = arith.mulf %135, %131 : vector<8x128xf32>
    %137 = arith.mulf %136, %131 : vector<8x128xf32>
    %138 = arith.addf %131, %137 : vector<8x128xf32>
    %cst_50 = arith.constant 0.797884583 : f32
    %139 = vector.broadcast %cst_50 : f32 to vector<8x128xf32>
    %140 = arith.mulf %139, %138 : vector<8x128xf32>
    %141 = math.tanh %140 : vector<8x128xf32>
    %cst_51 = arith.constant 1.000000e+00 : f32
    %142 = vector.broadcast %cst_51 : f32 to vector<8x128xf32>
    %143 = arith.addf %142, %141 : vector<8x128xf32>
    %144 = arith.mulf %133, %143 : vector<8x128xf32>
    %145 = arith.truncf %144 : vector<8x128xf32> to vector<8x128xbf16>
    %c0_52 = arith.constant 0 : index
    %c0_53 = arith.constant 0 : index
    %146 = vector.load %arg13[%c0_52, %c0_53] : memref<128x32xbf16, #tpu.memory_space<vmem>>, vector<128x32xbf16>
    %cst_54 = arith.constant dense<0.000000e+00> : vector<8x32xf32>
    %147 = tpu.matmul %145, %146, %cst_54 {dimension_numbers = #tpu.dot_dimension_numbers<[1], [0], [0], [1], [0, 0, 1, 1], [], []>} : vector<8x128xbf16>, vector<128x32xbf16>, vector<8x32xf32> -> vector<8x32xf32>
    %c0_55 = arith.constant 0 : index
    %c0_56 = arith.constant 0 : index
    %148 = vector.load %arg14[%c0_55, %c0_56] : memref<1x32xf32, #tpu.memory_space<vmem>>, vector<1x32xf32>
    %149 = vector.shape_cast %148 : vector<1x32xf32> to vector<32xf32>
    %150 = vector.shape_cast %149 : vector<32xf32> to vector<1x32xf32>
    %151 = vector.broadcast %150 : vector<1x32xf32> to vector<8x32xf32>
    %152 = arith.addf %147, %151 : vector<8x32xf32>
    %153 = arith.addf %95, %152 : vector<8x32xf32>
    %c0_57 = arith.constant 0 : index
    %c0_58 = arith.constant 0 : index
    %c0_59 = arith.constant 0 : index
    %154 = vector.load %arg15[%c0_57, %c0_58, %c0_59] : memref<1x8x32xf32, #tpu.memory_space<vmem>>, vector<1x8x32xf32>
    %155 = vector.shape_cast %154 : vector<1x8x32xf32> to vector<8x32xf32>
    %156 = vector.shape_cast %153 : vector<8x32xf32> to vector<1x8x32xf32>
    tpu.vector_store %arg15[%c0_57, %c0_58, %c0_59], %156 {strides = array<i32>} : memref<1x8x32xf32, #tpu.memory_space<vmem>>, vector<1x8x32xf32>,
    return
  }
  func.func @transform_0(%arg0: i32) -> (i32, i32, i32) {
    %c0_i32 = arith.constant 0 : i32
    %c0_i32_0 = arith.constant 0 : i32
    %c0_i32_1 = arith.constant 0 : i32
    return %arg0, %c0_i32, %c0_i32_0 : i32, i32, i32
  }
  func.func @transform_1(%arg0: i32) -> (i32, i32) {
    %c0_i32 = arith.constant 0 : i32
    %c0_i32_0 = arith.constant 0 : i32
    %c0_i32_1 = arith.constant 0 : i32
    return %c0_i32, %c0_i32_0 : i32, i32
  }
  func.func @transform_2(%arg0: i32) -> (i32, i32) {
    %c0_i32 = arith.constant 0 : i32
    %c0_i32_0 = arith.constant 0 : i32
    %c0_i32_1 = arith.constant 0 : i32
    return %c0_i32, %c0_i32_0 : i32, i32
  }
  func.func @transform_3(%arg0: i32) -> (i32, i32) {
    %c0_i32 = arith.constant 0 : i32
    %c0_i32_0 = arith.constant 0 : i32
    %c0_i32_1 = arith.constant 0 : i32
    return %c0_i32, %c0_i32_0 : i32, i32
  }
  func.func @transform_4(%arg0: i32) -> (i32, i32) {
    %c0_i32 = arith.constant 0 : i32
    %c0_i32_0 = arith.constant 0 : i32
    %c0_i32_1 = arith.constant 0 : i32
    return %c0_i32, %c0_i32_0 : i32, i32
  }
  func.func @transform_5(%arg0: i32) -> (i32, i32) {
    %c0_i32 = arith.constant 0 : i32
    %c0_i32_0 = arith.constant 0 : i32
    %c0_i32_1 = arith.constant 0 : i32
    return %c0_i32, %c0_i32_0 : i32, i32
  }
  func.func @transform_6(%arg0: i32) -> (i32, i32) {
    %c0_i32 = arith.constant 0 : i32
    %c0_i32_0 = arith.constant 0 : i32
    %c0_i32_1 = arith.constant 0 : i32
    return %c0_i32, %c0_i32_0 : i32, i32
  }
  func.func @transform_7(%arg0: i32) -> (i32, i32) {
    %c0_i32 = arith.constant 0 : i32
    %c0_i32_0 = arith.constant 0 : i32
    %c0_i32_1 = arith.constant 0 : i32
    return %c0_i32, %c0_i32_0 : i32, i32
  }
  func.func @transform_8(%arg0: i32) -> (i32, i32) {
    %c0_i32 = arith.constant 0 : i32
    %c0_i32_0 = arith.constant 0 : i32
    %c0_i32_1 = arith.constant 0 : i32
    return %c0_i32, %c0_i32_0 : i32, i32
  }
  func.func @transform_9(%arg0: i32) -> (i32, i32) {
    %c0_i32 = arith.constant 0 : i32
    %c0_i32_0 = arith.constant 0 : i32
    %c0_i32_1 = arith.constant 0 : i32
    return %c0_i32, %c0_i32_0 : i32, i32
  }
  func.func @transform_10(%arg0: i32) -> (i32, i32) {
    %c0_i32 = arith.constant 0 : i32
    %c0_i32_0 = arith.constant 0 : i32
    %c0_i32_1 = arith.constant 0 : i32
    return %c0_i32, %c0_i32_0 : i32, i32
  }
  func.func @transform_11(%arg0: i32) -> (i32, i32) {
    %c0_i32 = arith.constant 0 : i32
    %c0_i32_0 = arith.constant 0 : i32
    %c0_i32_1 = arith.constant 0 : i32
    return %c0_i32, %c0_i32_0 : i32, i32
  }
  func.func @transform_12(%arg0: i32) -> (i32, i32) {
    %c0_i32 = arith.constant 0 : i32
    %c0_i32_0 = arith.constant 0 : i32
    %c0_i32_1 = arith.constant 0 : i32
    return %c0_i32, %c0_i32_0 : i32, i32
  }
  func.func @transform_13(%arg0: i32) -> (i32, i32) {
    %c0_i32 = arith.constant 0 : i32
    %c0_i32_0 = arith.constant 0 : i32
    %c0_i32_1 = arith.constant 0 : i32
    return %c0_i32, %c0_i32_0 : i32, i32
  }
  func.func @transform_14(%arg0: i32) -> (i32, i32, i32) {
    %c0_i32 = arith.constant 0 : i32
    %c0_i32_0 = arith.constant 0 : i32
    %c0_i32_1 = arith.constant 0 : i32
    return %arg0, %c0_i32, %c0_i32_0 : i32, i32, i32
  }
}

</mosaic_0001>

<llo_original>
// kernel: tpu_custom_call.1
$region0: #{tpu_custom_call.1}
  #allocation0 [shape = 'u32[]', space=smem, size = 0x4, offset = 0x4, fixed_abs, tag = 'smem constant byte address 0x4 - core index']
  #allocation1 [shape = 'u32[144,128]{1,0:T(1,128)}', space=vmem, size = 0x12000, scoped, tag = 'internal scratch']
  %s0 = inlined_call_operand.vmem [shape: f32[2,8,32], index: 0, kind: input, shape index: {}]
  %s1 = inlined_call_operand.vmem [shape: f32[8,8], index: 1, kind: input, shape index: {}]
  %s2 = inlined_call_operand.vmem [shape: f32[1,32], index: 2, kind: input, shape index: {}]
  %s3 = inlined_call_operand.vmem [shape: f32[1,32], index: 3, kind: input, shape index: {}]
  %s4 = inlined_call_operand.vmem [shape: bf16[32,96], index: 4, kind: input, shape index: {}]
  %s5 = inlined_call_operand.vmem [shape: f32[1,96], index: 5, kind: input, shape index: {}]
  %s6 = inlined_call_operand.vmem [shape: bf16[32,32], index: 6, kind: input, shape index: {}]
  %s7 = inlined_call_operand.vmem [shape: f32[1,32], index: 7, kind: input, shape index: {}]
  %s8 = inlined_call_operand.vmem [shape: f32[1,32], index: 8, kind: input, shape index: {}]
  %s9 = inlined_call_operand.vmem [shape: f32[1,32], index: 9, kind: input, shape index: {}]
  %s10 = inlined_call_operand.vmem [shape: bf16[32,128], index: 10, kind: input, shape index: {}]
  %s11 = inlined_call_operand.vmem [shape: f32[1,128], index: 11, kind: input, shape index: {}]
  %s12 = inlined_call_operand.vmem [shape: bf16[128,32], index: 12, kind: input, shape index: {}]
  %s13 = inlined_call_operand.vmem [shape: f32[1,32], index: 13, kind: input, shape index: {}]
  %s14 = inlined_call_operand.hbm [shape: f32[2,8,32], index: 14, kind: output, shape index: {}]
  %s15 = sld [smem:[#allocation0]]
  $region89: #{tpu_custom_call.1} parent=0
    _
  %s17 = ssub.s32 1, %s15
  %s18 = scalar_select 0, %s17, %s15
  $region1: #{tpu_custom_call.1} parent=0
    #allocation2 [shape = 'u8[8192]{0}', space=vmem, size = 0x2000, scoped, tag = 'output window, operand 0']
    #allocation3 [shape = 's32[2]{0}', space=sflag, size = 0x8, scoped, tag = 'scoped memory for tpu_custom_call.1']
    %19 = vsyncpa [#allocation3], 0
    %s20 = scalar_lea.sflag [#allocation3], 1
    %21 = vsyncpa %s20, 0
    loop: start=0, step=1, limit=4
    $region2: #{tpu_custom_call.1} parent=1 // loop_pre_header
      _
    $region3: #{tpu_custom_call.1} parent=1 // loop_header
      %s23 = sphi 0, %s27
      %p24 = scmp.ge.s32.totalorder %s23, 4
      %s33 = sphi 0, %s35
      %s36 = sphi 0, %s33
      %s37 = sphi 0, %s36
      %s53 = sphi 0, %s37
      %s57 = sphi 0, %s57
      %s59 = sphi 0, %s57
      %s60 = sphi 0, %s59
      %s74 = sphi 0, %s60
      %s78 = sphi 0, %s78
      %s80 = sphi 0, %s78
      %s81 = sphi 0, %s80
      %s95 = sphi 0, %s81
      %s99 = sphi 0, %s99
      %s101 = sphi 0, %s99
      %s102 = sphi 0, %s101
      %s116 = sphi 0, %s102
      %s120 = sphi 0, %s120
      %s122 = sphi 0, %s120
      %s123 = sphi 0, %s122
      %s137 = sphi 0, %s123
      %s141 = sphi 0, %s141
      %s143 = sphi 0, %s141
      %s144 = sphi 0, %s143
      %s158 = sphi 0, %s144
      %s162 = sphi 0, %s162
      %s164 = sphi 0, %s162
      %s165 = sphi 0, %s164
      %s179 = sphi 0, %s165
      %s183 = sphi 0, %s183
      %s185 = sphi 0, %s183
      %s186 = sphi 0, %s185
      %s200 = sphi 0, %s186
      %s204 = sphi 0, %s204
      %s206 = sphi 0, %s204
      %s207 = sphi 0, %s206
      %s221 = sphi 0, %s207
      %s225 = sphi 0, %s225
      %s227 = sphi 0, %s225
      %s228 = sphi 0, %s227
      %s242 = sphi 0, %s228
      %s246 = sphi 0, %s246
      %s248 = sphi 0, %s246
      %s249 = sphi 0, %s248
      %s263 = sphi 0, %s249
      %s267 = sphi 0, %s267
      %s269 = sphi 0, %s267
      %s270 = sphi 0, %s269
      %s284 = sphi 0, %s270
      %s288 = sphi 0, %s288
      %s290 = sphi 0, %s288
      %s291 = sphi 0, %s290
      %s305 = sphi 0, %s291
      %s309 = sphi 0, %s309
      %s311 = sphi 0, %s309
      %s312 = sphi 0, %s311
      %s326 = sphi 0, %s312
      %s332 = sphi 0, %s334
      %s335 = sphi 0, %s332
      %s336 = sphi 0, %s335
      %s352 = sphi 0, %s336
    $region4: #{tpu_custom_call.1} parent=1 // loop_header_branch
      %26 = sbr.rel (%p24) target = $region8
    $region5: #{tpu_custom_call.1} parent=1 // loop_body
      %s28 = ssub.s32 %s23, 1
      %s29 = ssub.s32 %s23, 2
      %s30 = sadd.s32 %s23, 1
      %s31 = ssub.s32 %s23, %s30
      %p32 = scmp.eq.s32.totalorder %s31, 0
      %s34 = sadd.s32 %s33, 1
      %s35 = scalar_select %p32, %s33, %s34
      %p38 = pneg %p32
      %p39 = scmp.eq.s32.totalorder %s23, 1
      %p40 = por %p38, %p39
      %p41 = scmp.ne.s32.totalorder %s33, %s36
      %p42 = scmp.eq.s32.totalorder %s23, 0
      %p43 = por %p41, %p42
      %p44 = scmp.ne.s32.totalorder %s33, %s36
      %p45 = scmp.eq.s32.totalorder %s28, 1
      %p46 = por %p44, %p45
      %p47 = scmp.ne.s32.totalorder %s36, %s37
      %p48 = scmp.eq.s32.totalorder %s28, 0
      %p49 = por %p47, %p48
      %p50 = scmp.ne.s32.totalorder %s36, %s37
      %p51 = scmp.eq.s32.totalorder %s29, 1
      %p52 = por %p50, %p51
      %p54 = scmp.ne.s32.totalorder %s37, %s53
      %p55 = scmp.eq.s32.totalorder %s29, 0
      %p56 = por %p54, %p55
      %s58 = sadd.s32 %s57, 1
      %p61 = scmp.eq.s32.totalorder %s23, 1
      %p62 = scmp.ne.s32.totalorder %s57, %s59
      %p63 = scmp.eq.s32.totalorder %s23, 0
      %p64 = por %p62, %p63
      %p65 = scmp.ne.s32.totalorder %s57, %s59
      %p66 = scmp.eq.s32.totalorder %s28, 1
      %p67 = por %p65, %p66
      %p68 = scmp.ne.s32.totalorder %s59, %s60
      %p69 = scmp.eq.s32.totalorder %s28, 0
      %p70 = por %p68, %p69
      %p71 = scmp.ne.s32.totalorder %s59, %s60
      %p72 = scmp.eq.s32.totalorder %s29, 1
      %p73 = por %p71, %p72
      %p75 = scmp.ne.s32.totalorder %s60, %s74
      %p76 = scmp.eq.s32.totalorder %s29, 0
      %p77 = por %p75, %p76
      %s79 = sadd.s32 %s78, 1
      %p82 = scmp.eq.s32.totalorder %s23, 1
      %p83 = scmp.ne.s32.totalorder %s78, %s80
      %p84 = scmp.eq.s32.totalorder %s23, 0
      %p85 = por %p83, %p84
      %p86 = scmp.ne.s32.totalorder %s78, %s80
      %p87 = scmp.eq.s32.totalorder %s28, 1
      %p88 = por %p86, %p87
      %p89 = scmp.ne.s32.totalorder %s80, %s81
      %p90 = scmp.eq.s32.totalorder %s28, 0
      %p91 = por %p89, %p90
      %p92 = scmp.ne.s32.totalorder %s80, %s81
      %p93 = scmp.eq.s32.totalorder %s29, 1
      %p94 = por %p92, %p93
      %p96 = scmp.ne.s32.totalorder %s81, %s95
      %p97 = scmp.eq.s32.totalorder %s29, 0
      %p98 = por %p96, %p97
      %s100 = sadd.s32 %s99, 1
      %p103 = scmp.eq.s32.totalorder %s23, 1
      %p104 = scmp.ne.s32.totalorder %s99, %s101
      %p105 = scmp.eq.s32.totalorder %s23, 0
      %p106 = por %p104, %p105
      %p107 = scmp.ne.s32.totalorder %s99, %s101
      %p108 = scmp.eq.s32.totalorder %s28, 1
      %p109 = por %p107, %p108
      %p110 = scmp.ne.s32.totalorder %s101, %s102
      %p111 = scmp.eq.s32.totalorder %s28, 0
      %p112 = por %p110, %p111
      %p113 = scmp.ne.s32.totalorder %s101, %s102
      %p114 = scmp.eq.s32.totalorder %s29, 1
      %p115 = por %p113, %p114
      %p117 = scmp.ne.s32.totalorder %s102, %s116
      %p118 = scmp.eq.s32.totalorder %s29, 0
      %p119 = por %p117, %p118
      %s121 = sadd.s32 %s120, 1
      %p124 = scmp.eq.s32.totalorder %s23, 1
      %p125 = scmp.ne.s32.totalorder %s120, %s122
      %p126 = scmp.eq.s32.totalorder %s23, 0
      %p127 = por %p125, %p126
      %p128 = scmp.ne.s32.totalorder %s120, %s122
      %p129 = scmp.eq.s32.totalorder %s28, 1
      %p130 = por %p128, %p129
      %p131 = scmp.ne.s32.totalorder %s122, %s123
      %p132 = scmp.eq.s32.totalorder %s28, 0
      %p133 = por %p131, %p132
      %p134 = scmp.ne.s32.totalorder %s122, %s123
      %p135 = scmp.eq.s32.totalorder %s29, 1
      %p136 = por %p134, %p135
      %p138 = scmp.ne.s32.totalorder %s123, %s137
      %p139 = scmp.eq.s32.totalorder %s29, 0
      %p140 = por %p138, %p139
      %s142 = sadd.s32 %s141, 1
      %p145 = scmp.eq.s32.totalorder %s23, 1
      %p146 = scmp.ne.s32.totalorder %s141, %s143
      %p147 = scmp.eq.s32.totalorder %s23, 0
      %p148 = por %p146, %p147
      %p149 = scmp.ne.s32.totalorder %s141, %s143
      %p150 = scmp.eq.s32.totalorder %s28, 1
      %p151 = por %p149, %p150
      %p152 = scmp.ne.s32.totalorder %s143, %s144
      %p153 = scmp.eq.s32.totalorder %s28, 0
      %p154 = por %p152, %p153
      %p155 = scmp.ne.s32.totalorder %s143, %s144
      %p156 = scmp.eq.s32.totalorder %s29, 1
      %p157 = por %p155, %p156
      %p159 = scmp.ne.s32.totalorder %s144, %s158
      %p160 = scmp.eq.s32.totalorder %s29, 0
      %p161 = por %p159, %p160
      %s163 = sadd.s32 %s162, 1
      %p166 = scmp.eq.s32.totalorder %s23, 1
      %p167 = scmp.ne.s32.totalorder %s162, %s164
      %p168 = scmp.eq.s32.totalorder %s23, 0
      %p169 = por %p167, %p168
      %p170 = scmp.ne.s32.totalorder %s162, %s164
      %p171 = scmp.eq.s32.totalorder %s28, 1
      %p172 = por %p170, %p171
      %p173 = scmp.ne.s32.totalorder %s164, %s165
      %p174 = scmp.eq.s32.totalorder %s28, 0
      %p175 = por %p173, %p174
      %p176 = scmp.ne.s32.totalorder %s164, %s165
      %p177 = scmp.eq.s32.totalorder %s29, 1
      %p178 = por %p176, %p177
      %p180 = scmp.ne.s32.totalorder %s165, %s179
      %p181 = scmp.eq.s32.totalorder %s29, 0
      %p182 = por %p180, %p181
      %s184 = sadd.s32 %s183, 1
      %p187 = scmp.eq.s32.totalorder %s23, 1
      %p188 = scmp.ne.s32.totalorder %s183, %s185
      %p189 = scmp.eq.s32.totalorder %s23, 0
      %p190 = por %p188, %p189
      %p191 = scmp.ne.s32.totalorder %s183, %s185
      %p192 = scmp.eq.s32.totalorder %s28, 1
      %p193 = por %p191, %p192
      %p194 = scmp.ne.s32.totalorder %s185, %s186
      %p195 = scmp.eq.s32.totalorder %s28, 0
      %p196 = por %p194, %p195
      %p197 = scmp.ne.s32.totalorder %s185, %s186
      %p198 = scmp.eq.s32.totalorder %s29, 1
      %p199 = por %p197, %p198
      %p201 = scmp.ne.s32.totalorder %s186, %s200
      %p202 = scmp.eq.s32.totalorder %s29, 0
      %p203 = por %p201, %p202
      %s205 = sadd.s32 %s204, 1
      %p208 = scmp.eq.s32.totalorder %s23, 1
      %p209 = scmp.ne.s32.totalorder %s204, %s206
      %p210 = scmp.eq.s32.totalorder %s23, 0
      %p211 = por %p209, %p210
      %p212 = scmp.ne.s32.totalorder %s204, %s206
      %p213 = scmp.eq.s32.totalorder %s28, 1
      %p214 = por %p212, %p213
      %p215 = scmp.ne.s32.totalorder %s206, %s207
      %p216 = scmp.eq.s32.totalorder %s28, 0
      %p217 = por %p215, %p216
      %p218 = scmp.ne.s32.totalorder %s206, %s207
      %p219 = scmp.eq.s32.totalorder %s29, 1
      %p220 = por %p218, %p219
      %p222 = scmp.ne.s32.totalorder %s207, %s221
      %p223 = scmp.eq.s32.totalorder %s29, 0
      %p224 = por %p222, %p223
      %s226 = sadd.s32 %s225, 1
      %p229 = scmp.eq.s32.totalorder %s23, 1
      %p230 = scmp.ne.s32.totalorder %s225, %s227
      %p231 = scmp.eq.s32.totalorder %s23, 0
      %p232 = por %p230, %p231
      %p233 = scmp.ne.s32.totalorder %s225, %s227
      %p234 = scmp.eq.s32.totalorder %s28, 1
      %p235 = por %p233, %p234
      %p236 = scmp.ne.s32.totalorder %s227, %s228
      %p237 = scmp.eq.s32.totalorder %s28, 0
      %p238 = por %p236, %p237
      %p239 = scmp.ne.s32.totalorder %s227, %s228
      %p240 = scmp.eq.s32.totalorder %s29, 1
      %p241 = por %p239, %p240
      %p243 = scmp.ne.s32.totalorder %s228, %s242
      %p244 = scmp.eq.s32.totalorder %s29, 0
      %p245 = por %p243, %p244
      %s247 = sadd.s32 %s246, 1
      %p250 = scmp.eq.s32.totalorder %s23, 1
      %p251 = scmp.ne.s32.totalorder %s246, %s248
      %p252 = scmp.eq.s32.totalorder %s23, 0
      %p253 = por %p251, %p252
      %p254 = scmp.ne.s32.totalorder %s246, %s248
      %p255 = scmp.eq.s32.totalorder %s28, 1
      %p256 = por %p254, %p255
      %p257 = scmp.ne.s32.totalorder %s248, %s249
      %p258 = scmp.eq.s32.totalorder %s28, 0
      %p259 = por %p257, %p258
      %p260 = scmp.ne.s32.totalorder %s248, %s249
      %p261 = scmp.eq.s32.totalorder %s29, 1
      %p262 = por %p260, %p261
      %p264 = scmp.ne.s32.totalorder %s249, %s263
      %p265 = scmp.eq.s32.totalorder %s29, 0
      %p266 = por %p264, %p265
      %s268 = sadd.s32 %s267, 1
      %p271 = scmp.eq.s32.totalorder %s23, 1
      %p272 = scmp.ne.s32.totalorder %s267, %s269
      %p273 = scmp.eq.s32.totalorder %s23, 0
      %p274 = por %p272, %p273
      %p275 = scmp.ne.s32.totalorder %s267, %s269
      %p276 = scmp.eq.s32.totalorder %s28, 1
      %p277 = por %p275, %p276
      %p278 = scmp.ne.s32.totalorder %s269, %s270
      %p279 = scmp.eq.s32.totalorder %s28, 0
      %p280 = por %p278, %p279
      %p281 = scmp.ne.s32.totalorder %s269, %s270
      %p282 = scmp.eq.s32.totalorder %s29, 1
      %p283 = por %p281, %p282
      %p285 = scmp.ne.s32.totalorder %s270, %s284
      %p286 = scmp.eq.s32.totalorder %s29, 0
      %p287 = por %p285, %p286
      %s289 = sadd.s32 %s288, 1
      %p292 = scmp.eq.s32.totalorder %s23, 1
      %p293 = scmp.ne.s32.totalorder %s288, %s290
      %p294 = scmp.eq.s32.totalorder %s23, 0
      %p295 = por %p293, %p294
      %p296 = scmp.ne.s32.totalorder %s288, %s290
      %p297 = scmp.eq.s32.totalorder %s28, 1
      %p298 = por %p296, %p297
      %p299 = scmp.ne.s32.totalorder %s290, %s291
      %p300 = scmp.eq.s32.totalorder %s28, 0
      %p301 = por %p299, %p300
      %p302 = scmp.ne.s32.totalorder %s290, %s291
      %p303 = scmp.eq.s32.totalorder %s29, 1
      %p304 = por %p302, %p303
      %p306 = scmp.ne.s32.totalorder %s291, %s305
      %p307 = scmp.eq.s32.totalorder %s29, 0
      %p308 = por %p306, %p307
      %s310 = sadd.s32 %s309, 1
      %p313 = scmp.eq.s32.totalorder %s23, 1
      %p314 = scmp.ne.s32.totalorder %s309, %s311
      %p315 = scmp.eq.s32.totalorder %s23, 0
      %p316 = por %p314, %p315
      %p317 = scmp.ne.s32.totalorder %s309, %s311
      %p318 = scmp.eq.s32.totalorder %s28, 1
      %p319 = por %p317, %p318
      %p320 = scmp.ne.s32.totalorder %s311, %s312
      %p321 = scmp.eq.s32.totalorder %s28, 0
      %p322 = por %p320, %p321
      %p323 = scmp.ne.s32.totalorder %s311, %s312
      %p324 = scmp.eq.s32.totalorder %s29, 1
      %p325 = por %p323, %p324
      %p327 = scmp.ne.s32.totalorder %s312, %s326
      %p328 = scmp.eq.s32.totalorder %s29, 0
      %p329 = por %p327, %p328
      %s330 = ssub.s32 %s23, %s30
      %p331 = scmp.eq.s32.totalorder %s330, 0
      %s333 = sadd.s32 %s332, 1
      %s334 = scalar_select %p331, %s332, %s333
      %p337 = pneg %p331
      %p338 = scmp.eq.s32.totalorder %s23, 1
      %p339 = por %p337, %p338
      %p340 = scmp.ne.s32.totalorder %s332, %s335
      %p341 = scmp.eq.s32.totalorder %s23, 0
      %p342 = por %p340, %p341
      %p343 = scmp.ne.s32.totalorder %s332, %s335
      %p344 = scmp.eq.s32.totalorder %s28, 1
      %p345 = por %p343, %p344
      %p346 = scmp.ne.s32.totalorder %s335, %s336
      %p347 = scmp.eq.s32.totalorder %s28, 0
      %p348 = por %p346, %p347
      %p349 = scmp.ne.s32.totalorder %s335, %s336
      %p350 = scmp.eq.s32.totalorder %s29, 1
      %p351 = por %p349, %p350
      %p353 = scmp.ne.s32.totalorder %s336, %s352
      %p354 = scmp.eq.s32.totalorder %s29, 0
      %p355 = por %p353, %p354
      %p356 = scmp.le.s32.totalorder 1, %s23
      %p357 = scmp.lt.s32.totalorder %s23, 3
      %p358 = pnand %p356, %p357
      %p359 = pneg %p358
      // Predicated region
      $region9: #{tpu_custom_call.1} parent=5 // pred_check
        _
      $region10: #{tpu_custom_call.1} parent=5 // pred_check_branch
        %361 = sbr.rel (%p358) target = $region12
      $region11: #{tpu_custom_call.1} parent=5 // pred_region
        %s362 = ssub.s32 %s23, 1
        // Predicated region
        $region13: #{tpu_custom_call.1} parent=11 // pred_check
          %p363 = pneg %p70
        $region14: #{tpu_custom_call.1} parent=11 // pred_check_branch
          %365 = sbr.rel (%p363) target = $region16
        $region15: #{tpu_custom_call.1} parent=11 // pred_region
          _
        $region16: #{tpu_custom_call.1} parent=11 // pred_fallthru
          _
        // Predicated region
        $region17: #{tpu_custom_call.1} parent=11 // pred_check
          %p366 = pneg %p91
        $region18: #{tpu_custom_call.1} parent=11 // pred_check_branch
          %368 = sbr.rel (%p366) target = $region20
        $region19: #{tpu_custom_call.1} parent=11 // pred_region
          _
        $region20: #{tpu_custom_call.1} parent=11 // pred_fallthru
          _
        // Predicated region
        $region21: #{tpu_custom_call.1} parent=11 // pred_check
          %p369 = pneg %p112
        $region22: #{tpu_custom_call.1} parent=11 // pred_check_branch
          %371 = sbr.rel (%p369) target = $region24
        $region23: #{tpu_custom_call.1} parent=11 // pred_region
          _
        $region24: #{tpu_custom_call.1} parent=11 // pred_fallthru
          _
        // Predicated region
        $region25: #{tpu_custom_call.1} parent=11 // pred_check
          %p372 = pneg %p133
        $region26: #{tpu_custom_call.1} parent=11 // pred_check_branch
          %374 = sbr.rel (%p372) target = $region28
        $region27: #{tpu_custom_call.1} parent=11 // pred_region
          _
        $region28: #{tpu_custom_call.1} parent=11 // pred_fallthru
          _
        // Predicated region
        $region29: #{tpu_custom_call.1} parent=11 // pred_check
          %p375 = pneg %p154
        $region30: #{tpu_custom_call.1} parent=11 // pred_check_branch
          %377 = sbr.rel (%p375) target = $region32
        $region31: #{tpu_custom_call.1} parent=11 // pred_region
          _
        $region32: #{tpu_custom_call.1} parent=11 // pred_fallthru
          _
        // Predicated region
        $region33: #{tpu_custom_call.1} parent=11 // pred_check
          %p378 = pneg %p175
        $region34: #{tpu_custom_call.1} parent=11 // pred_check_branch
          %380 = sbr.rel (%p378) target = $region36
        $region35: #{tpu_custom_call.1} parent=11 // pred_region
          _
        $region36: #{tpu_custom_call.1} parent=11 // pred_fallthru
          _
        // Predicated region
        $region37: #{tpu_custom_call.1} parent=11 // pred_check
          %p381 = pneg %p196
        $region38: #{tpu_custom_call.1} parent=11 // pred_check_branch
          %383 = sbr.rel (%p381) target = $region40
        $region39: #{tpu_custom_call.1} parent=11 // pred_region
          _
        $region40: #{tpu_custom_call.1} parent=11 // pred_fallthru
          _
        // Predicated region
        $region41: #{tpu_custom_call.1} parent=11 // pred_check
          %p384 = pneg %p217
        $region42: #{tpu_custom_call.1} parent=11 // pred_check_branch
          %386 = sbr.rel (%p384) target = $region44
        $region43: #{tpu_custom_call.1} parent=11 // pred_region
          _
        $region44: #{tpu_custom_call.1} parent=11 // pred_fallthru
          _
        // Predicated region
        $region45: #{tpu_custom_call.1} parent=11 // pred_check
          %p387 = pneg %p238
        $region46: #{tpu_custom_call.1} parent=11 // pred_check_branch
          %389 = sbr.rel (%p387) target = $region48
        $region47: #{tpu_custom_call.1} parent=11 // pred_region
          _
        $region48: #{tpu_custom_call.1} parent=11 // pred_fallthru
          _
        // Predicated region
        $region49: #{tpu_custom_call.1} parent=11 // pred_check
          %p390 = pneg %p259
        $region50: #{tpu_custom_call.1} parent=11 // pred_check_branch
          %392 = sbr.rel (%p390) target = $region52
        $region51: #{tpu_custom_call.1} parent=11 // pred_region
          _
        $region52: #{tpu_custom_call.1} parent=11 // pred_fallthru
          _
        // Predicated region
        $region53: #{tpu_custom_call.1} parent=11 // pred_check
          %p393 = pneg %p280
        $region54: #{tpu_custom_call.1} parent=11 // pred_check_branch
          %395 = sbr.rel (%p393) target = $region56
        $region55: #{tpu_custom_call.1} parent=11 // pred_region
          _
        $region56: #{tpu_custom_call.1} parent=11 // pred_fallthru
          _
        // Predicated region
        $region57: #{tpu_custom_call.1} parent=11 // pred_check
          %p396 = pneg %p301
        $region58: #{tpu_custom_call.1} parent=11 // pred_check_branch
          %398 = sbr.rel (%p396) target = $region60
        $region59: #{tpu_custom_call.1} parent=11 // pred_region
          _
        $region60: #{tpu_custom_call.1} parent=11 // pred_fallthru
          _
        // Predicated region
        $region61: #{tpu_custom_call.1} parent=11 // pred_check
          %p399 = pneg %p322
        $region62: #{tpu_custom_call.1} parent=11 // pred_check_branch
          %401 = sbr.rel (%p399) target = $region64
        $region63: #{tpu_custom_call.1} parent=11 // pred_region
          _
        $region64: #{tpu_custom_call.1} parent=11 // pred_fallthru
          _
      $region12: #{tpu_custom_call.1} parent=5 // pred_fallthru
        _
      %p402 = scmp.lt.s32.totalorder %s23, 2
      // Predicated region
      $region65: #{tpu_custom_call.1} parent=5 // pred_check
        %p403 = pneg %p402
      $region66: #{tpu_custom_call.1} parent=5 // pred_check_branch
        %405 = sbr.rel (%p403) target = $region68
      $region67: #{tpu_custom_call.1} parent=5 // pred_region
        // Predicated region
        $region69: #{tpu_custom_call.1} parent=67 // pred_check
          %p406 = pneg %p43
        $region70: #{tpu_custom_call.1} parent=67 // pred_check_branch
          %408 = sbr.rel (%p406) target = $region72
        $region71: #{tpu_custom_call.1} parent=67 // pred_region
          %p409 = scmp.lt.s32.totalorder %s23, 1
          %s410 = scalar_select %p409, %s23, 1
          %s411 = smul.addr %s410, 8
          %s412 = scalar_lea.vmem %s0, %s411
        $region72: #{tpu_custom_call.1} parent=67 // pred_fallthru
          _
      $region68: #{tpu_custom_call.1} parent=5 // pred_fallthru
        _
      %p413 = scmp.le.s32.totalorder 1, %s23
      %p414 = scmp.lt.s32.totalorder %s23, 3
      %p415 = pnand %p413, %p414
      %p416 = pneg %p415
      // Predicated region
      $region73: #{tpu_custom_call.1} parent=5 // pred_check
        _
      $region74: #{tpu_custom_call.1} parent=5 // pred_check_branch
        %418 = sbr.rel (%p415) target = $region76
      $region75: #{tpu_custom_call.1} parent=5 // pred_region
        %s419 = ssub.s32 %s23, 1
        %p420 = scmp.lt.s32.totalorder %s28, 1
        %s421 = scalar_select %p420, %s28, 1
        %s422 = smul.addr %s421, 8
        %s423 = scalar_lea.vmem %s0, %s422
        %p424 = pneg %p49
        %p425 = pneg %p46
        %p426 = pneg %p70
        %p427 = pneg %p67
        %p428 = pneg %p91
        %p429 = pneg %p88
        %p430 = pneg %p112
        %p431 = pneg %p109
        %p432 = pneg %p133
        %p433 = pneg %p130
        %p434 = pneg %p154
        %p435 = pneg %p151
        %p436 = pneg %p175
        %p437 = pneg %p172
        %p438 = pneg %p196
        %p439 = pneg %p193
        %p440 = pneg %p217
        %p441 = pneg %p214
        %p442 = pneg %p238
        %p443 = pneg %p235
        %p444 = pneg %p259
        %p445 = pneg %p256
        %p446 = pneg %p280
        %p447 = pneg %p277
        %p448 = pneg %p301
        %p449 = pneg %p298
        %p450 = pneg %p322
        %p451 = pneg %p319
        %p452 = pneg %p348
        %p453 = pneg %p345
        %s454 = sand.u32 %s335, 1
        %s455 = scalar_lea.sflag [#allocation3], %s454
        %s456 = sand.u32 %s335, 1
        %s457 = smul.addr %s456, 8
        %s458 = scalar_lea.vmem [#allocation2], %s457
        %p459 = scmp.lt.s32.totalorder %s28, 1
        %s460 = scalar_select %p459, %s28, 1
        %s461 = smul.addr %s460, 8
        %s462 = scalar_lea.vmem %s0, %s461
        %v464 = vld [vmem:[%s462] sm:$0xff]
        %v465 = vld [vmem:[%s1] sm:$0xff]
        %v466 = vld [vmem:[%s2] sm:$0x1]
        %v467 = vld [vmem:[%s3] sm:$0x1]
        %vm468 = vcmask 261120
        %v469 = vsel %vm468, %v464, 0.0
        %470 = vadd.xlane.f32.xlu0 %v469
        %v471 = vpop.xlane.xlu0 %470
        %v472 = vrcp.pop 32.0
        %v473 = vmul.f32 %v471, %v472
        %v474 = vsub.f32 %v464, %v473
        %v475 = vmul.f32 %v474, %v474
        %v476 = vsel %vm468, %v475, 0.0
        %477 = vadd.xlane.f32.xlu0 %v476
        %v478 = vpop.xlane.xlu0 %477
        %v479 = vmul.f32 %v478, %v472
        %v480 = vadd.f32 %v479, 1e-05
        %v481 = vrsqrt.pop %v480
        %v482 = vmul.f32 %v474, %v481
        %v484 = vlaneseq
        %v485 = vshrl.u32 %v484, 7
        %v486 = vsub.s32 0, %v485
        %v487 = vrot.slane %v466, %v486
        %v489 = vmul.f32 %v482, %v487
        %v491 = vlaneseq
        %v492 = vshrl.u32 %v491, 7
        %v493 = vsub.s32 0, %v492
        %v494 = vrot.slane %v467, %v493
        %v496 = vadd.f32 %v489, %v494
        %v497 = vpack.c.bf16 %v496, %v496
        %v498 = vld [vmem:[%s4] sm:$0xf]
        %v499 = vld [vmem:[%s4 + $0x4] sm:$0xf]
        %v500 = vld [vmem:[%s4 + $0x8] sm:$0xf]
        %v501 = vld [vmem:[%s4 + $0xc] sm:$0xf]
        %v502 = vld [vmem:[%s5] sm:$0x1]
        %v504 = vlaneseq
        %v505 = vshrl.u32 %v504, 7
        %v506 = vsub.s32 0, %v505
        %v507 = vrot.slane %v502, %v506
        %v513 = vunpack.c.l.b16 %v498
        %v514 = vunpack.c.l.b16 %v499
        %v515 = vunpack.c.l.b16 %v500
        %v516 = vunpack.c.l.b16 %v501
        %v517 = vpack.c.b16 %v514, %v513
        %v518 = vpack.c.b16 %v516, %v515
        %v522 = vsel %vm468, %v497, 0
        %524 = vmatprep.subr.bf16.mxu0 0
        %525 = vmatpush1.bf16.msra.mxu0 %v517
        %526 = vmatprep.subr.bf16.mxu0 0
        %527 = vmatpush1.bf16.msra.mxu0 %v518
        %528 = vmatprep.subr.bf16.mxu0 0
        %529 = vmatpush1.bf16.msra.mxu0 0
        %530 = vmatprep.subr.bf16.mxu0 0
        %531 = vmatpush1.bf16.msra.mxu0 0
        %532 = vmatprep.subr.bf16.mxu0 0
        %533 = vmatpush1.bf16.msra.mxu0 0
        %534 = vmatprep.subr.bf16.mxu0 0
        %535 = vmatpush1.bf16.msra.mxu0 0
        %536 = vmatprep.subr.bf16.mxu0 0
        %537 = vmatpush1.bf16.msra.mxu0 0
        %538 = vmatprep.subr.bf16.mxu0 0
        %539 = vmatpush1.bf16.msra.mxu0 0
        %540 = vmatprep.subr.bf16.mxu0 0
        %541 = vmatpush1.bf16.msra.mxu0 0
        %542 = vmatprep.subr.bf16.mxu0 0
        %543 = vmatpush1.bf16.msra.mxu0 0
        %544 = vmatprep.subr.bf16.mxu0 0
        %545 = vmatpush1.bf16.msra.mxu0 0
        %546 = vmatprep.subr.bf16.mxu0 0
        %547 = vmatpush1.bf16.msra.mxu0 0
        %548 = vmatprep.subr.bf16.mxu0 0
        %549 = vmatpush1.bf16.msra.mxu0 0
        %550 = vmatprep.subr.bf16.mxu0 0
        %551 = vmatpush1.bf16.msra.mxu0 0
        %552 = vmatprep.subr.bf16.mxu0 0
        %553 = vmatpush1.bf16.msra.mxu0 0
        %554 = vmatprep.subr.bf16.mxu0 0
        %555 = vmatpush1.bf16.msra.mxu0 0
        %556 = vmatprep.mubr.bf16.mxu0 0
        %557 = vmatmul.mubr.bf16.gmra.mrb[0].mxu0 %v522
        %v558 = vpop.f32.mrb[0].mxu0
        %v559 = vadd.f32 %v507, %v558
        %v560 = vpop.f32.mrb[0].mxu0
        %v561 = vpop.f32.mrb[0].mxu0
        %v562 = vpop.f32.mrb[0].mxu0
        %563 = vdwg.mxu0
        %v564 = vmul.f32 %v559, 0.25
        %v565 = vpack.c.bf16 %v564, %v564
        %v566 = vpack.c.bf16 %v559, %v559
        %568 = vrot.lane.b32.xlu0 %v566, 96
        %v569 = vpop.permute.xlu0 %568
        %vm570 = vcmask 130048
        %v572 = vsel %vm570, %v565, 0
        %v575 = vsel %vm570, %v569, 0
        %577 = vmatprep.subr.bf16.mxu0 0
        %578 = vmatpush1.bf16.xpose.msra.mxu0 %v575
        %579 = vmatprep.subr.bf16.mxu0 0
        %580 = vmatpush1.bf16.xpose.msra.mxu0 0
        %581 = vmatprep.subr.bf16.mxu0 0
        %582 = vmatpush1.bf16.xpose.msra.mxu0 0
        %583 = vmatprep.subr.bf16.mxu0 0
        %584 = vmatpush1.bf16.xpose.msra.mxu0 0
        %585 = vmatprep.subr.bf16.mxu0 0
        %586 = vmatpush1.bf16.xpose.msra.mxu0 0
        %587 = vmatprep.subr.bf16.mxu0 0
        %588 = vmatpush1.bf16.xpose.msra.mxu0 0
        %589 = vmatprep.subr.bf16.mxu0 0
        %590 = vmatpush1.bf16.xpose.msra.mxu0 0
        %591 = vmatprep.subr.bf16.mxu0 0
        %592 = vmatpush1.bf16.xpose.msra.mxu0 0
        %593 = vmatprep.subr.bf16.mxu0 0
        %594 = vmatpush1.bf16.xpose.msra.mxu0 0
        %595 = vmatprep.subr.bf16.mxu0 0
        %596 = vmatpush1.bf16.xpose.msra.mxu0 0
        %597 = vmatprep.subr.bf16.mxu0 0
        %598 = vmatpush1.bf16.xpose.msra.mxu0 0
        %599 = vmatprep.subr.bf16.mxu0 0
        %600 = vmatpush1.bf16.xpose.msra.mxu0 0
        %601 = vmatprep.subr.bf16.mxu0 0
        %602 = vmatpush1.bf16.xpose.msra.mxu0 0
        %603 = vmatprep.subr.bf16.mxu0 0
        %604 = vmatpush1.bf16.xpose.msra.mxu0 0
        %605 = vmatprep.subr.bf16.mxu0 0
        %606 = vmatpush1.bf16.xpose.msra.mxu0 0
        %607 = vmatprep.subr.bf16.mxu0 0
        %608 = vmatpush1.bf16.xpose.msra.mxu0 0
        %609 = vmatprep.mubr.bf16.mxu0 0
        %610 = vmatmul.mubr.bf16.gmra.mrb[0].mxu0 %v572
        %v611 = vpop.f32.mrb[0].mxu0
        %v612 = vadd.f32 %v465, %v611
        %v613 = vpop.f32.mrb[0].mxu0
        %v614 = vpop.f32.mrb[0].mxu0
        %v615 = vpop.f32.mrb[0].mxu0
        %616 = vdwg.mxu0
        %vm617 = vcmask 64512
        %v618 = vsel %vm617, %v612, -inf
        %619 = vmax.xlane.f32.xlu0 %v618
        %v620 = vpop.xlane.xlu0 %619
        %v621 = vsub.f32 %v612, %v620
        %v622 = vmul.f32 %v621, 1.442695
        %v623 = vpow.pop %v622
        %v624 = vsel %vm617, %v623, 0.0
        %625 = vadd.xlane.f32.xlu0 %v624
        %v626 = vpop.xlane.xlu0 %625
        %v627 = vrcp.pop %v626
        %v628 = vmul.f32 %v623, %v627
        %v629 = vpack.c.bf16 %v628, %v628
        %630 = vrot.lane.b32.xlu0 %v566, 64
        %v631 = vpop.permute.xlu0 %630
        %v633 = vsel %vm617, %v629, 0
        %vm635 = vcmask 1043456
        %v637 = vsel %vm635, %v631, 0
        %639 = vmatprep.subr.bf16.mxu0 0
        %640 = vmatpush1.bf16.msra.mxu0 %v637
        %641 = vmatprep.subr.bf16.mxu0 0
        %642 = vmatpush1.bf16.msra.mxu0 0
        %643 = vmatprep.subr.bf16.mxu0 0
        %644 = vmatpush1.bf16.msra.mxu0 0
        %645 = vmatprep.subr.bf16.mxu0 0
        %646 = vmatpush1.bf16.msra.mxu0 0
        %647 = vmatprep.subr.bf16.mxu0 0
        %648 = vmatpush1.bf16.msra.mxu0 0
        %649 = vmatprep.subr.bf16.mxu0 0
        %650 = vmatpush1.bf16.msra.mxu0 0
        %651 = vmatprep.subr.bf16.mxu0 0
        %652 = vmatpush1.bf16.msra.mxu0 0
        %653 = vmatprep.subr.bf16.mxu0 0
        %654 = vmatpush1.bf16.msra.mxu0 0
        %655 = vmatprep.subr.bf16.mxu0 0
        %656 = vmatpush1.bf16.msra.mxu0 0
        %657 = vmatprep.subr.bf16.mxu0 0
        %658 = vmatpush1.bf16.msra.mxu0 0
        %659 = vmatprep.subr.bf16.mxu0 0
        %660 = vmatpush1.bf16.msra.mxu0 0
        %661 = vmatprep.subr.bf16.mxu0 0
        %662 = vmatpush1.bf16.msra.mxu0 0
        %663 = vmatprep.subr.bf16.mxu0 0
        %664 = vmatpush1.bf16.msra.mxu0 0
        %665 = vmatprep.subr.bf16.mxu0 0
        %666 = vmatpush1.bf16.msra.mxu0 0
        %667 = vmatprep.subr.bf16.mxu0 0
        %668 = vmatpush1.bf16.msra.mxu0 0
        %669 = vmatprep.subr.bf16.mxu0 0
        %670 = vmatpush1.bf16.msra.mxu0 0
        %671 = vmatprep.mubr.bf16.mxu0 0
        %672 = vmatmul.mubr.bf16.gmra.mrb[0].mxu0 %v633
        %v673 = vpop.f32.mrb[0].mxu0
        %v674 = vadd.f32 0.0, %v673
        %v675 = vpop.f32.mrb[0].mxu0
        %v676 = vpop.f32.mrb[0].mxu0
        %v677 = vpop.f32.mrb[0].mxu0
        %678 = vdwg.mxu0
        %v679 = vpack.c.bf16 %v674, %v674
        %v680 = vld [vmem:[%s6] sm:$0xf]
        %v681 = vld [vmem:[%s6 + $0x4] sm:$0xf]
        %683 = vrot.lane.b32.xlu0 %v565, 112
        %v684 = vpop.permute.xlu0 %683
        %685 = vrot.lane.b32.xlu0 %v566, 80
        %v686 = vpop.permute.xlu0 %685
        %v688 = vsel %vm570, %v684, 0
        %v691 = vsel %vm570, %v686, 0
        %693 = vmatprep.subr.bf16.mxu0 0
        %694 = vmatpush1.bf16.xpose.msra.mxu0 %v691
        %695 = vmatprep.subr.bf16.mxu0 0
        %696 = vmatpush1.bf16.xpose.msra.mxu0 0
        %697 = vmatprep.subr.bf16.mxu0 0
        %698 = vmatpush1.bf16.xpose.msra.mxu0 0
        %699 = vmatprep.subr.bf16.mxu0 0
        %700 = vmatpush1.bf16.xpose.msra.mxu0 0
        %701 = vmatprep.subr.bf16.mxu0 0
        %702 = vmatpush1.bf16.xpose.msra.mxu0 0
        %703 = vmatprep.subr.bf16.mxu0 0
        %704 = vmatpush1.bf16.xpose.msra.mxu0 0
        %705 = vmatprep.subr.bf16.mxu0 0
        %706 = vmatpush1.bf16.xpose.msra.mxu0 0
        %707 = vmatprep.subr.bf16.mxu0 0
        %708 = vmatpush1.bf16.xpose.msra.mxu0 0
        %709 = vmatprep.subr.bf16.mxu0 0
        %710 = vmatpush1.bf16.xpose.msra.mxu0 0
        %711 = vmatprep.subr.bf16.mxu0 0
        %712 = vmatpush1.bf16.xpose.msra.mxu0 0
        %713 = vmatprep.subr.bf16.mxu0 0
        %714 = vmatpush1.bf16.xpose.msra.mxu0 0
        %715 = vmatprep.subr.bf16.mxu0 0
        %716 = vmatpush1.bf16.xpose.msra.mxu0 0
        %717 = vmatprep.subr.bf16.mxu0 0
        %718 = vmatpush1.bf16.xpose.msra.mxu0 0
        %719 = vmatprep.subr.bf16.mxu0 0
        %720 = vmatpush1.bf16.xpose.msra.mxu0 0
        %721 = vmatprep.subr.bf16.mxu0 0
        %722 = vmatpush1.bf16.xpose.msra.mxu0 0
        %723 = vmatprep.subr.bf16.mxu0 0
        %724 = vmatpush1.bf16.xpose.msra.mxu0 0
        %725 = vmatprep.mubr.bf16.mxu0 0
        %726 = vmatmul.mubr.bf16.gmra.mrb[0].mxu0 %v688
        %v727 = vpop.f32.mrb[0].mxu0
        %v728 = vadd.f32 %v465, %v727
        %v729 = vpop.f32.mrb[0].mxu0
        %v730 = vpop.f32.mrb[0].mxu0
        %v731 = vpop.f32.mrb[0].mxu0
        %732 = vdwg.mxu0
        %v733 = vsel %vm617, %v728, -inf
        %734 = vmax.xlane.f32.xlu0 %v733
        %v735 = vpop.xlane.xlu0 %734
        %v736 = vsub.f32 %v728, %v735
        %v737 = vmul.f32 %v736, 1.442695
        %v738 = vpow.pop %v737
        %v739 = vsel %vm617, %v738, 0.0
        %740 = vadd.xlane.f32.xlu0 %v739
        %v741 = vpop.xlane.xlu0 %740
        %v742 = vrcp.pop %v741
        %v743 = vmul.f32 %v738, %v742
        %v744 = vpack.c.bf16 %v743, %v743
        %745 = vrot.lane.b32.xlu0 %v566, 48
        %v746 = vpop.permute.xlu0 %745
        %v748 = vsel %vm617, %v744, 0
        %v751 = vsel %vm635, %v746, 0
        %753 = vmatprep.subr.bf16.mxu0 0
        %754 = vmatpush1.bf16.msra.mxu0 %v751
        %755 = vmatprep.subr.bf16.mxu0 0
        %756 = vmatpush1.bf16.msra.mxu0 0
        %757 = vmatprep.subr.bf16.mxu0 0
        %758 = vmatpush1.bf16.msra.mxu0 0
        %759 = vmatprep.subr.bf16.mxu0 0
        %760 = vmatpush1.bf16.msra.mxu0 0
        %761 = vmatprep.subr.bf16.mxu0 0
        %762 = vmatpush1.bf16.msra.mxu0 0
        %763 = vmatprep.subr.bf16.mxu0 0
        %764 = vmatpush1.bf16.msra.mxu0 0
        %765 = vmatprep.subr.bf16.mxu0 0
        %766 = vmatpush1.bf16.msra.mxu0 0
        %767 = vmatprep.subr.bf16.mxu0 0
        %768 = vmatpush1.bf16.msra.mxu0 0
        %769 = vmatprep.subr.bf16.mxu0 0
        %770 = vmatpush1.bf16.msra.mxu0 0
        %771 = vmatprep.subr.bf16.mxu0 0
        %772 = vmatpush1.bf16.msra.mxu0 0
        %773 = vmatprep.subr.bf16.mxu0 0
        %774 = vmatpush1.bf16.msra.mxu0 0
        %775 = vmatprep.subr.bf16.mxu0 0
        %776 = vmatpush1.bf16.msra.mxu0 0
        %777 = vmatprep.subr.bf16.mxu0 0
        %778 = vmatpush1.bf16.msra.mxu0 0
        %779 = vmatprep.subr.bf16.mxu0 0
        %780 = vmatpush1.bf16.msra.mxu0 0
        %781 = vmatprep.subr.bf16.mxu0 0
        %782 = vmatpush1.bf16.msra.mxu0 0
        %783 = vmatprep.subr.bf16.mxu0 0
        %784 = vmatpush1.bf16.msra.mxu0 0
        %785 = vmatprep.mubr.bf16.mxu0 0
        %786 = vmatmul.mubr.bf16.gmra.mrb[0].mxu0 %v748
        %v787 = vpop.f32.mrb[0].mxu0
        %v788 = vadd.f32 0.0, %v787
        %v789 = vpop.f32.mrb[0].mxu0
        %v790 = vpop.f32.mrb[0].mxu0
        %v791 = vpop.f32.mrb[0].mxu0
        %792 = vdwg.mxu0
        %v793 = vpack.c.bf16 %v788, %v788
        %v794 = vld [vmem:[%s6 + $0x8] sm:$0xf]
        %v795 = vld [vmem:[%s6 + $0xc] sm:$0xf]
        %v798 = vunpack.c.l.b16 %v794
        %v799 = vunpack.c.l.b16 %v795
        %v800 = vpack.c.b16 %v799, %v798
        %v803 = vsel %vm570, %v793, 0
        %805 = vmatprep.subr.bf16.mxu0 0
        %806 = vmatpush1.bf16.msra.mxu0 %v800
        %807 = vmatprep.subr.bf16.mxu0 0
        %808 = vmatpush1.bf16.msra.mxu0 0
        %809 = vmatprep.subr.bf16.mxu0 0
        %810 = vmatpush1.bf16.msra.mxu0 0
        %811 = vmatprep.subr.bf16.mxu0 0
        %812 = vmatpush1.bf16.msra.mxu0 0
        %813 = vmatprep.subr.bf16.mxu0 0
        %814 = vmatpush1.bf16.msra.mxu0 0
        %815 = vmatprep.subr.bf16.mxu0 0
        %816 = vmatpush1.bf16.msra.mxu0 0
        %817 = vmatprep.subr.bf16.mxu0 0
        %818 = vmatpush1.bf16.msra.mxu0 0
        %819 = vmatprep.subr.bf16.mxu0 0
        %820 = vmatpush1.bf16.msra.mxu0 0
        %821 = vmatprep.subr.bf16.mxu0 0
        %822 = vmatpush1.bf16.msra.mxu0 0
        %823 = vmatprep.subr.bf16.mxu0 0
        %824 = vmatpush1.bf16.msra.mxu0 0
        %825 = vmatprep.subr.bf16.mxu0 0
        %826 = vmatpush1.bf16.msra.mxu0 0
        %827 = vmatprep.subr.bf16.mxu0 0
        %828 = vmatpush1.bf16.msra.mxu0 0
        %829 = vmatprep.subr.bf16.mxu0 0
        %830 = vmatpush1.bf16.msra.mxu0 0
        %831 = vmatprep.subr.bf16.mxu0 0
        %832 = vmatpush1.bf16.msra.mxu0 0
        %833 = vmatprep.subr.bf16.mxu0 0
        %834 = vmatpush1.bf16.msra.mxu0 0
        %835 = vmatprep.subr.bf16.mxu0 0
        %836 = vmatpush1.bf16.msra.mxu0 0
        %837 = vmatprep.mubr.bf16.mxu0 0
        %838 = vmatmul.mubr.bf16.gmra.mrb[0].mxu0 %v803
        %v839 = vpop.f32.mrb[0].mxu0
        %v840 = vadd.f32 0.0, %v839
        %v841 = vpop.f32.mrb[0].mxu0
        %v842 = vpop.f32.mrb[0].mxu0
        %v843 = vpop.f32.mrb[0].mxu0
        %844 = vdwg.mxu0
        %v847 = vunpack.c.l.b16 %v680
        %v848 = vunpack.c.l.b16 %v681
        %v849 = vpack.c.b16 %v848, %v847
        %v852 = vsel %vm570, %v679, 0
        %854 = vmatprep.subr.bf16.mxu0 0
        %855 = vmatpush1.bf16.msra.mxu0 %v849
        %856 = vmatprep.subr.bf16.mxu0 0
        %857 = vmatpush1.bf16.msra.mxu0 0
        %858 = vmatprep.subr.bf16.mxu0 0
        %859 = vmatpush1.bf16.msra.mxu0 0
        %860 = vmatprep.subr.bf16.mxu0 0
        %861 = vmatpush1.bf16.msra.mxu0 0
        %862 = vmatprep.subr.bf16.mxu0 0
        %863 = vmatpush1.bf16.msra.mxu0 0
        %864 = vmatprep.subr.bf16.mxu0 0
        %865 = vmatpush1.bf16.msra.mxu0 0
        %866 = vmatprep.subr.bf16.mxu0 0
        %867 = vmatpush1.bf16.msra.mxu0 0
        %868 = vmatprep.subr.bf16.mxu0 0
        %869 = vmatpush1.bf16.msra.mxu0 0
        %870 = vmatprep.subr.bf16.mxu0 0
        %871 = vmatpush1.bf16.msra.mxu0 0
        %872 = vmatprep.subr.bf16.mxu0 0
        %873 = vmatpush1.bf16.msra.mxu0 0
        %874 = vmatprep.subr.bf16.mxu0 0
        %875 = vmatpush1.bf16.msra.mxu0 0
        %876 = vmatprep.subr.bf16.mxu0 0
        %877 = vmatpush1.bf16.msra.mxu0 0
        %878 = vmatprep.subr.bf16.mxu0 0
        %879 = vmatpush1.bf16.msra.mxu0 0
        %880 = vmatprep.subr.bf16.mxu0 0
        %881 = vmatpush1.bf16.msra.mxu0 0
        %882 = vmatprep.subr.bf16.mxu0 0
        %883 = vmatpush1.bf16.msra.mxu0 0
        %884 = vmatprep.subr.bf16.mxu0 0
        %885 = vmatpush1.bf16.msra.mxu0 0
        %886 = vmatprep.mubr.bf16.mxu0 0
        %887 = vmatmul.mubr.bf16.gmra.mrb[0].mxu0 %v852
        %v888 = vpop.f32.mrb[0].mxu0
        %v889 = vadd.f32 %v840, %v888
        %v890 = vpop.f32.mrb[0].mxu0
        %v891 = vpop.f32.mrb[0].mxu0
        %v892 = vpop.f32.mrb[0].mxu0
        %893 = vdwg.mxu0
        %v894 = vadd.f32 %v464, %v889
        %v895 = vld [vmem:[%s7] sm:$0x1]
        %v897 = vlaneseq
        %v898 = vshrl.u32 %v897, 7
        %v899 = vsub.s32 0, %v898
        %v900 = vrot.slane %v895, %v899
        %v902 = vadd.f32 %v894, %v900
        %v903 = vld [vmem:[%s8] sm:$0x1]
        %v904 = vld [vmem:[%s9] sm:$0x1]
        %v905 = vsel %vm468, %v902, 0.0
        %906 = vadd.xlane.f32.xlu0 %v905
        %v907 = vpop.xlane.xlu0 %906
        %v908 = vmul.f32 %v907, %v472
        %v909 = vsub.f32 %v902, %v908
        %v910 = vmul.f32 %v909, %v909
        %v911 = vsel %vm468, %v910, 0.0
        %912 = vadd.xlane.f32.xlu0 %v911
        %v913 = vpop.xlane.xlu0 %912
        %v914 = vmul.f32 %v913, %v472
        %v915 = vadd.f32 %v914, 1e-05
        %v916 = vrsqrt.pop %v915
        %v917 = vmul.f32 %v909, %v916
        %v919 = vlaneseq
        %v920 = vshrl.u32 %v919, 7
        %v921 = vsub.s32 0, %v920
        %v922 = vrot.slane %v903, %v921
        %v924 = vmul.f32 %v917, %v922
        %v926 = vlaneseq
        %v927 = vshrl.u32 %v926, 7
        %v928 = vsub.s32 0, %v927
        %v929 = vrot.slane %v904, %v928
        %v931 = vadd.f32 %v924, %v929
        %v932 = vpack.c.bf16 %v931, %v931
        %v933 = vld [vmem:[%s10] sm:$0xf]
        %v934 = vld [vmem:[%s10 + $0x4] sm:$0xf]
        %v935 = vld [vmem:[%s10 + $0x8] sm:$0xf]
        %v936 = vld [vmem:[%s10 + $0xc] sm:$0xf]
        %v937 = vld [vmem:[%s11] sm:$0x1]
        %v939 = vlaneseq
        %v940 = vshrl.u32 %v939, 7
        %v941 = vsub.s32 0, %v940
        %v942 = vrot.slane %v937, %v941
        %v948 = vunpack.c.l.b16 %v933
        %v949 = vunpack.c.l.b16 %v934
        %v950 = vunpack.c.l.b16 %v935
        %v951 = vunpack.c.l.b16 %v936
        %v952 = vpack.c.b16 %v949, %v948
        %v953 = vpack.c.b16 %v951, %v950
        %v957 = vsel %vm468, %v932, 0
        %959 = vmatprep.subr.bf16.mxu0 0
        %960 = vmatpush1.bf16.msra.mxu0 %v952
        %961 = vmatprep.subr.bf16.mxu0 0
        %962 = vmatpush1.bf16.msra.mxu0 %v953
        %963 = vmatprep.subr.bf16.mxu0 0
        %964 = vmatpush1.bf16.msra.mxu0 0
        %965 = vmatprep.subr.bf16.mxu0 0
        %966 = vmatpush1.bf16.msra.mxu0 0
        %967 = vmatprep.subr.bf16.mxu0 0
        %968 = vmatpush1.bf16.msra.mxu0 0
        %969 = vmatprep.subr.bf16.mxu0 0
        %970 = vmatpush1.bf16.msra.mxu0 0
        %971 = vmatprep.subr.bf16.mxu0 0
        %972 = vmatpush1.bf16.msra.mxu0 0
        %973 = vmatprep.subr.bf16.mxu0 0
        %974 = vmatpush1.bf16.msra.mxu0 0
        %975 = vmatprep.subr.bf16.mxu0 0
        %976 = vmatpush1.bf16.msra.mxu0 0
        %977 = vmatprep.subr.bf16.mxu0 0
        %978 = vmatpush1.bf16.msra.mxu0 0
        %979 = vmatprep.subr.bf16.mxu0 0
        %980 = vmatpush1.bf16.msra.mxu0 0
        %981 = vmatprep.subr.bf16.mxu0 0
        %982 = vmatpush1.bf16.msra.mxu0 0
        %983 = vmatprep.subr.bf16.mxu0 0
        %984 = vmatpush1.bf16.msra.mxu0 0
        %985 = vmatprep.subr.bf16.mxu0 0
        %986 = vmatpush1.bf16.msra.mxu0 0
        %987 = vmatprep.subr.bf16.mxu0 0
        %988 = vmatpush1.bf16.msra.mxu0 0
        %989 = vmatprep.subr.bf16.mxu0 0
        %990 = vmatpush1.bf16.msra.mxu0 0
        %991 = vmatprep.mubr.bf16.mxu0 0
        %992 = vmatmul.mubr.bf16.gmra.mrb[0].mxu0 %v957
        %v993 = vpop.f32.mrb[0].mxu0
        %v994 = vadd.f32 %v942, %v993
        %v995 = vpop.f32.mrb[0].mxu0
        %v996 = vpop.f32.mrb[0].mxu0
        %v997 = vpop.f32.mrb[0].mxu0
        %998 = vdwg.mxu0
        %v999 = vmul.f32 %v994, 0.5
        %v1000 = vmul.f32 %v994, 0.044715
        %v1001 = vmul.f32 %v1000, %v994
        %v1002 = vmul.f32 %v1001, %v994
        %v1003 = vadd.f32 %v994, %v1002
        %v1004 = vmul.f32 %v1003, 0.7978846
        %v1005 = vtanh.pop %v1004
        %v1006 = vadd.f32 %v1005, 1.0
        %v1007 = vmul.f32 %v999, %v1006
        %v1008 = vpack.c.bf16 %v1007, %v1007
        %v1009 = vld [vmem:[%s12] sm:$0xf]
        %v1010 = vld [vmem:[%s12 + $0x4] sm:$0xf]
        %v1011 = vld [vmem:[%s12 + $0x8] sm:$0xf]
        %v1012 = vld [vmem:[%s12 + $0xc] sm:$0xf]
        %v1013 = vld [vmem:[%s12 + $0x10] sm:$0xf]
        %v1014 = vld [vmem:[%s12 + $0x14] sm:$0xf]
        %v1015 = vld [vmem:[%s12 + $0x18] sm:$0xf]
        %v1016 = vld [vmem:[%s12 + $0x1c] sm:$0xf]
        %v1017 = vld [vmem:[%s12 + $0x20] sm:$0xf]
        %v1018 = vld [vmem:[%s12 + $0x24] sm:$0xf]
        %v1019 = vld [vmem:[%s12 + $0x28] sm:$0xf]
        %v1020 = vld [vmem:[%s12 + $0x2c] sm:$0xf]
        %v1021 = vld [vmem:[%s12 + $0x30] sm:$0xf]
        %v1022 = vld [vmem:[%s12 + $0x34] sm:$0xf]
        %v1023 = vld [vmem:[%s12 + $0x38] sm:$0xf]
        %v1024 = vld [vmem:[%s12 + $0x3c] sm:$0xf]
        %v1025 = vld [vmem:[%s13] sm:$0x1]
        %v1027 = vlaneseq
        %v1028 = vshrl.u32 %v1027, 7
        %v1029 = vsub.s32 0, %v1028
        %v1030 = vrot.slane %v1025, %v1029
        %v1048 = vunpack.c.l.b16 %v1009
        %v1049 = vunpack.c.l.b16 %v1010
        %v1050 = vunpack.c.l.b16 %v1011
        %v1051 = vunpack.c.l.b16 %v1012
        %v1052 = vunpack.c.l.b16 %v1013
        %v1053 = vunpack.c.l.b16 %v1014
        %v1054 = vunpack.c.l.b16 %v1015
        %v1055 = vunpack.c.l.b16 %v1016
        %v1056 = vunpack.c.l.b16 %v1017
        %v1057 = vunpack.c.l.b16 %v1018
        %v1058 = vunpack.c.l.b16 %v1019
        %v1059 = vunpack.c.l.b16 %v1020
        %v1060 = vunpack.c.l.b16 %v1021
        %v1061 = vunpack.c.l.b16 %v1022
        %v1062 = vunpack.c.l.b16 %v1023
        %v1063 = vunpack.c.l.b16 %v1024
        %v1064 = vpack.c.b16 %v1049, %v1048
        %v1065 = vpack.c.b16 %v1051, %v1050
        %v1066 = vpack.c.b16 %v1053, %v1052
        %v1067 = vpack.c.b16 %v1055, %v1054
        %v1068 = vpack.c.b16 %v1057, %v1056
        %v1069 = vpack.c.b16 %v1059, %v1058
        %v1070 = vpack.c.b16 %v1061, %v1060
        %v1071 = vpack.c.b16 %v1063, %v1062
        %1080 = vmatprep.subr.bf16.mxu0 0
        %1081 = vmatpush1.bf16.msra.mxu0 %v1064
        %1082 = vmatprep.subr.bf16.mxu0 0
        %1083 = vmatpush1.bf16.msra.mxu0 %v1065
        %1084 = vmatprep.subr.bf16.mxu0 0
        %1085 = vmatpush1.bf16.msra.mxu0 %v1066
        %1086 = vmatprep.subr.bf16.mxu0 0
        %1087 = vmatpush1.bf16.msra.mxu0 %v1067
        %1088 = vmatprep.subr.bf16.mxu0 0
        %1089 = vmatpush1.bf16.msra.mxu0 %v1068
        %1090 = vmatprep.subr.bf16.mxu0 0
        %1091 = vmatpush1.bf16.msra.mxu0 %v1069
        %1092 = vmatprep.subr.bf16.mxu0 0
        %1093 = vmatpush1.bf16.msra.mxu0 %v1070
        %1094 = vmatprep.subr.bf16.mxu0 0
        %1095 = vmatpush1.bf16.msra.mxu0 %v1071
        %1096 = vmatprep.subr.bf16.mxu0 0
        %1097 = vmatpush1.bf16.msra.mxu0 0
        %1098 = vmatprep.subr.bf16.mxu0 0
        %1099 = vmatpush1.bf16.msra.mxu0 0
        %1100 = vmatprep.subr.bf16.mxu0 0
        %1101 = vmatpush1.bf16.msra.mxu0 0
        %1102 = vmatprep.subr.bf16.mxu0 0
        %1103 = vmatpush1.bf16.msra.mxu0 0
        %1104 = vmatprep.subr.bf16.mxu0 0
        %1105 = vmatpush1.bf16.msra.mxu0 0
        %1106 = vmatprep.subr.bf16.mxu0 0
        %1107 = vmatpush1.bf16.msra.mxu0 0
        %1108 = vmatprep.subr.bf16.mxu0 0
        %1109 = vmatpush1.bf16.msra.mxu0 0
        %1110 = vmatprep.subr.bf16.mxu0 0
        %1111 = vmatpush1.bf16.msra.mxu0 0
        %1112 = vmatprep.mubr.bf16.mxu0 0
        %1113 = vmatmul.mubr.bf16.gmra.mrb[0].mxu0 %v1008
        %v1114 = vpop.f32.mrb[0].mxu0
        %v1115 = vadd.f32 %v1030, %v1114
        %v1116 = vpop.f32.mrb[0].mxu0
        %v1117 = vpop.f32.mrb[0].mxu0
        %v1118 = vpop.f32.mrb[0].mxu0
        %1119 = vdwg.mxu0
        %v1120 = vadd.f32 %v902, %v1115
        %1121 = vst.msk [vmem:[%s458] sm:$0xff] %vm468, %v1120
        %s1122 = sand.u32 %s335, 1
        %s1123 = scalar_lea.sflag [#allocation3], %s1122
        %s1124 = sand.u32 %s335, 1
        %s1125 = smul.addr %s1124, 8
        %s1126 = scalar_lea.vmem [#allocation2], %s1125
        // Predicated region
        $region77: #{tpu_custom_call.1} parent=75 // pred_check
          %p1127 = pneg %p345
        $region78: #{tpu_custom_call.1} parent=75 // pred_check_branch
          %1129 = sbr.rel (%p1127) target = $region80
        $region79: #{tpu_custom_call.1} parent=75 // pred_region
          %s1131 = ssub.s32 128, 128
          %1132 = vsyncadd %s1123, %s1131
          %s1133 = smul.addr %s28, 128
          %s1134 = scalar_lea.hbm %s14, %s1133
          %s1136 = sshll.u32 %s1126, 4
          %s1137 = int_to_ptr.vmem [resolvable:$true] %s1136
          %1139 = dma.vmem_to_hbm [thread:$0]  %s1137, 128, %s1134, %s1123
        $region80: #{tpu_custom_call.1} parent=75 // pred_fallthru
          _
      $region76: #{tpu_custom_call.1} parent=5 // pred_fallthru
        _
      %p1140 = scmp.le.s32.totalorder 2, %s23
      // Predicated region
      $region81: #{tpu_custom_call.1} parent=5 // pred_check
        %p1141 = pneg %p1140
      $region82: #{tpu_custom_call.1} parent=5 // pred_check_branch
        %1143 = sbr.rel (%p1141) target = $region84
      $region83: #{tpu_custom_call.1} parent=5 // pred_region
        %s1144 = ssub.s32 %s23, 2
        // Predicated region
        $region85: #{tpu_custom_call.1} parent=83 // pred_check
          %p1145 = pneg %p351
        $region86: #{tpu_custom_call.1} parent=83 // pred_check_branch
          %1147 = sbr.rel (%p1145) target = $region88
        $region87: #{tpu_custom_call.1} parent=83 // pred_region
          %s1148 = sand.u32 %s336, 1
          %s1149 = scalar_lea.sflag [#allocation3], %s1148
          %s1150 = sand.u32 %s336, 1
          %s1151 = smul.addr %s1150, 8
          %s1152 = scalar_lea.vmem [#allocation2], %s1151
          %1153 = dma.done %s1149, 128
        $region88: #{tpu_custom_call.1} parent=83 // pred_fallthru
          _
      $region84: #{tpu_custom_call.1} parent=5 // pred_fallthru
        _
    $region6: #{tpu_custom_call.1} parent=1 // loop_footer
      %s27 = sadd.s32 1, %s23
    $region7: #{tpu_custom_call.1} parent=1 // loop_footer_branch
      %22 = sbr.rel target = $region3
    $region8: #{tpu_custom_call.1} parent=1 // loop_exit
      _
    %1154 = vsyncpa [#allocation3], 1
    %s1155 = scalar_lea.sflag [#allocation3], 1
    %1156 = vsyncpa %s1155, 1

</llo_original>
